<compile_context>
chip_gen: v7x
topology: tpu7x:2x2x1
jax: 0.10.0
libtpu: 0.0.40
codegen_flags: <defaults>
</compile_context>

<pallas_src>
import functools

import jax
import jax.numpy as jnp
from jax.experimental import pallas as pl
from jax.experimental.pallas import tpu as pltpu


def _conv_shift_kernel(x_ref, w_ref, b_ref, o_ref, *, KH, KW, Cin, Wp, OHd, OWd,
                       negative_slope):
    """Dense (stride-1) conv over one padded image via shifted whole-image matmuls.

    x_ref: (1, Cin, Hp*Wp)      compute dtype (bf16/f32), padded image, spatial flattened
    w_ref: (Cout, KH*KW*Cin)    compute dtype, tap-major then channel
    b_ref: (Cout, 1)            float32
    o_ref: (1, Cout, OHd*OWd)   output dtype, lane-dense flattened spatial
    """
    # Number of dense output columns needed so every (oh, ow) with ow < OWd is covered:
    # q = oh*Wp + ow.  Max tap read index = (KH-1)*Wp + (KW-1) + Q - 1 = Hp*Wp - 1 (in bounds).
    Q = (OHd - 1) * Wp + OWd

    w = w_ref[...]                                        # (Cout, KH*KW*Cin), one load

    # 9 accumulating whole-image MXU dots (one per tap), f32 accumulation.
    acc = None
    for kh in range(KH):
        for kw in range(KW):
            t = kh * KW + kw
            shift = kh * Wp + kw
            rhs = x_ref[0, :, shift:shift + Q]            # (Cin, Q) lane-shifted slab
            wt = w[:, t * Cin:(t + 1) * Cin]              # (Cout, Cin) slice of one load
            d = jnp.dot(wt, rhs, preferred_element_type=jnp.float32)   # (Cout, Q) f32
            acc = d if acc is None else acc + d

    # f32 epilogue (bias + LeakyReLU) on the whole image at once.
    y = acc + b_ref[...]                                  # broadcast (Cout,1)->(Cout,Q)
    if negative_slope is not None:
        y = jnp.where(y >= 0.0, y, negative_slope * y)

    # Compact the 286-wide dense result (row stride Wp) into the lane-dense 256-wide
    # output block (row stride OWd).  These are VMEM-local moves; the HBM writeback of
    # o_ref is a single dense DMA per image.
    for oh in range(OHd):
        o_ref[0, :, oh * OWd:(oh + 1) * OWd] = (
            y[:, oh * Wp: oh * Wp + OWd].astype(o_ref.dtype))


def conv_block(x_nchw, weight, bias, *, stride, padding, use_activation,
               compute_dtype=jnp.bfloat16):
    """ConvBlock forward.

    x_nchw: (N, Cin, H, W)       float32
    weight: (Cout, Cin, KH, KW)  float32 (PyTorch OIHW)
    bias:   (Cout,)              float32
    returns (N, Cout, OH, OW)    x_nchw.dtype
    """
    N, Cin, H, W = x_nchw.shape
    Cout, Cin_w, KH, KW = weight.shape
    assert Cin_w == Cin

    OH = (H + 2 * padding - KH) // stride + 1
    OW = (W + 2 * padding - KW) // stride + 1
    Hp = H + 2 * padding
    Wp = W + 2 * padding
    # Kernel always computes the dense (stride-1) output; stride > 1 is handled by
    # subsampling the dense result below (SRCNN uses stride=1 everywhere).
    OHd = Hp - KH + 1
    OWd = Wp - KW + 1

    # One fused layout pass on the activation: spatial zero-pad, cast, flatten (Hp,Wp)
    # into a single lane-dense axis.  No im2col patch matrix ever touches HBM.
    xp = jnp.pad(x_nchw, ((0, 0), (0, 0), (padding, padding), (padding, padding)))
    xp = xp.astype(compute_dtype).reshape(N, Cin, Hp * Wp)

    # Weights as one (Cout, KH*KW*Cin) matrix, tap-major then channel:
    # w_k[co, (kh*KW+kw)*Cin + c] = weight[co, c, kh, kw]
    w_k = jnp.transpose(weight, (0, 2, 3, 1)).reshape(Cout, KH * KW * Cin)
    w_k = w_k.astype(compute_dtype)
    b_k = bias.reshape(Cout, 1).astype(jnp.float32)

    kernel = functools.partial(
        _conv_shift_kernel, KH=KH, KW=KW, Cin=Cin, Wp=Wp, OHd=OHd, OWd=OWd,
        negative_slope=0.2 if use_activation else None)

    out_flat = pl.pallas_call(
        kernel,
        out_shape=jax.ShapeDtypeStruct((N, Cout, OHd * OWd), x_nchw.dtype),
        grid=(N,),
        in_specs=[
            pl.BlockSpec((1, Cin, Hp * Wp), lambda n: (n, 0, 0)),
            pl.BlockSpec((Cout, KH * KW * Cin), lambda n: (0, 0)),
            pl.BlockSpec((Cout, 1), lambda n: (0, 0)),
        ],
        out_specs=pl.BlockSpec((1, Cout, OHd * OWd), lambda n: (n, 0, 0)),
        compiler_params=pltpu.CompilerParams(
            dimension_semantics=("parallel",)),
    )(xp, w_k, b_k)

    out = out_flat.reshape(N, Cout, OHd, OWd)     # free reshape: already NCHW-ordered
    if stride > 1:
        out = out[:, :, ::stride, ::stride][:, :, :OH, :OW]
    return out


if __name__ == "__main__":
    # ConvBlock(in_channels=4, out_channels=8, kernel_size=3, stride=1,
    #           padding=1, use_activation=True)
    N, Cin, H, W = 2, 4, 16, 16
    Cout, K, stride, padding = 8, 3, 1, 1
    use_activation = True

    key = jax.random.PRNGKey(0)
    kx, kw_, kb = jax.random.split(key, 3)

    x = jax.random.normal(kx, (N, Cin, H, W), dtype=jnp.float32)

    # deterministic PyTorch-like init: U(-1/sqrt(fan_in), 1/sqrt(fan_in))
    fan_in = Cin * K * K
    bound = 1.0 / jnp.sqrt(jnp.float32(fan_in))
    weight = jax.random.uniform(kw_, (Cout, Cin, K, K), jnp.float32, -bound, bound)
    bias = jax.random.uniform(kb, (Cout,), jnp.float32, -bound, bound)

    out = conv_block(x, weight, bias, stride=stride, padding=padding,
                     use_activation=use_activation)
    out = jax.block_until_ready(out)

    # Reference with the same bf16-rounded inputs (kernel accumulates in f32).
    xq = x.astype(jnp.bfloat16).astype(jnp.float32)
    wq = weight.astype(jnp.bfloat16).astype(jnp.float32)
    ref = jax.lax.conv_general_dilated(
        xq, wq, window_strides=(stride, stride),
        padding=[(padding, padding), (padding, padding)],
        dimension_numbers=("NCHW", "OIHW", "NCHW"),
    ) + bias[None, :, None, None]
    if use_activation:
        ref = jnp.where(ref >= 0.0, ref, 0.2 * ref)

    assert out.shape == (N, Cout, H, W), out.shape
    err = float(jnp.max(jnp.abs(out - ref)))
    assert jnp.allclose(out, ref, atol=1e-3, rtol=1e-3), err

    print("KERNEL_OK")
</pallas_src>

<mosaic_0001>
module attributes {stable_mosaic.version = 11 : i64} {
  func.func @_conv_shift_kernel(%arg0: i32, %arg1: memref<1x4x324xbf16, #tpu.memory_space<vmem>>, %arg2: memref<8x36xbf16, #tpu.memory_space<vmem>>, %arg3: memref<8x1xf32, #tpu.memory_space<vmem>>, %arg4: memref<1x8x256xf32, #tpu.memory_space<vmem>>) attributes {dimension_semantics = [#tpu.dimension_semantics<parallel>], iteration_bounds = array<i64: 2>, scalar_prefetch = 0 : i64, scratch_operands = 0 : i64, tpu.core_type = #tpu.core_type<tc>, window_params = [{transform_indices = @transform_0, window_bounds = array<i64: 1, 4, 324>}, {pipeline_mode = #tpu.pipeline_mode<synchronous>, transform_indices = @transform_1, window_bounds = array<i64: 8, 36>}, {pipeline_mode = #tpu.pipeline_mode<synchronous>, transform_indices = @transform_2, window_bounds = array<i64: 8, 1>}, {transform_indices = @transform_3, window_bounds = array<i64: 1, 8, 256>}]} {
    %c0 = arith.constant 0 : index
    %c0_0 = arith.constant 0 : index
    %0 = vector.load %arg2[%c0, %c0_0] : memref<8x36xbf16, #tpu.memory_space<vmem>>, vector<8x36xbf16>
    %c0_1 = arith.constant 0 : index
    %c0_2 = arith.constant 0 : index
    %c0_3 = arith.constant 0 : index
    %1 = vector.load %arg1[%c0_1, %c0_2, %c0_3] : memref<1x4x324xbf16, #tpu.memory_space<vmem>>, vector<1x4x286xbf16>
    %2 = vector.shape_cast %1 : vector<1x4x286xbf16> to vector<4x286xbf16>
    %3 = vector.extract_strided_slice %0 {offsets = [0, 0], sizes = [8, 4], strides = [1, 1]} : vector<8x36xbf16> to vector<8x4xbf16>
    %cst = arith.constant dense<0.000000e+00> : vector<8x286xf32>
    %4 = tpu.matmul %3, %2, %cst {dimension_numbers = #tpu.dot_dimension_numbers<[1], [0], [0], [1], [0, 0, 1, 1], [], []>} : vector<8x4xbf16>, vector<4x286xbf16>, vector<8x286xf32> -> vector<8x286xf32>
    %c0_4 = arith.constant 0 : index
    %c0_5 = arith.constant 0 : index
    %c1 = arith.constant 1 : index
    %5 = vector.load %arg1[%c0_4, %c0_5, %c1] : memref<1x4x324xbf16, #tpu.memory_space<vmem>>, vector<1x4x286xbf16>
    %6 = vector.shape_cast %5 : vector<1x4x286xbf16> to vector<4x286xbf16>
    %7 = vector.extract_strided_slice %0 {offsets = [0, 4], sizes = [8, 4], strides = [1, 1]} : vector<8x36xbf16> to vector<8x4xbf16>
    %cst_6 = arith.constant dense<0.000000e+00> : vector<8x286xf32>
    %8 = tpu.matmul %7, %6, %cst_6 {dimension_numbers = #tpu.dot_dimension_numbers<[1], [0], [0], [1], [0, 0, 1, 1], [], []>} : vector<8x4xbf16>, vector<4x286xbf16>, vector<8x286xf32> -> vector<8x286xf32>
    %9 = arith.addf %4, %8 : vector<8x286xf32>
    %c0_7 = arith.constant 0 : index
    %c0_8 = arith.constant 0 : index
    %c2 = arith.constant 2 : index
    %10 = vector.load %arg1[%c0_7, %c0_8, %c2] : memref<1x4x324xbf16, #tpu.memory_space<vmem>>, vector<1x4x286xbf16>
    %11 = vector.shape_cast %10 : vector<1x4x286xbf16> to vector<4x286xbf16>
    %12 = vector.extract_strided_slice %0 {offsets = [0, 8], sizes = [8, 4], strides = [1, 1]} : vector<8x36xbf16> to vector<8x4xbf16>
    %cst_9 = arith.constant dense<0.000000e+00> : vector<8x286xf32>
    %13 = tpu.matmul %12, %11, %cst_9 {dimension_numbers = #tpu.dot_dimension_numbers<[1], [0], [0], [1], [0, 0, 1, 1], [], []>} : vector<8x4xbf16>, vector<4x286xbf16>, vector<8x286xf32> -> vector<8x286xf32>
    %14 = arith.addf %9, %13 : vector<8x286xf32>
    %c0_10 = arith.constant 0 : index
    %c0_11 = arith.constant 0 : index
    %c18 = arith.constant 18 : index
    %15 = vector.load %arg1[%c0_10, %c0_11, %c18] : memref<1x4x324xbf16, #tpu.memory_space<vmem>>, vector<1x4x286xbf16>
    %16 = vector.shape_cast %15 : vector<1x4x286xbf16> to vector<4x286xbf16>
    %17 = vector.extract_strided_slice %0 {offsets = [0, 12], sizes = [8, 4], strides = [1, 1]} : vector<8x36xbf16> to vector<8x4xbf16>
    %cst_12 = arith.constant dense<0.000000e+00> : vector<8x286xf32>
    %18 = tpu.matmul %17, %16, %cst_12 {dimension_numbers = #tpu.dot_dimension_numbers<[1], [0], [0], [1], [0, 0, 1, 1], [], []>} : vector<8x4xbf16>, vector<4x286xbf16>, vector<8x286xf32> -> vector<8x286xf32>
    %19 = arith.addf %14, %18 : vector<8x286xf32>
    %c0_13 = arith.constant 0 : index
    %c0_14 = arith.constant 0 : index
    %c19 = arith.constant 19 : index
    %20 = vector.load %arg1[%c0_13, %c0_14, %c19] : memref<1x4x324xbf16, #tpu.memory_space<vmem>>, vector<1x4x286xbf16>
    %21 = vector.shape_cast %20 : vector<1x4x286xbf16> to vector<4x286xbf16>
    %22 = vector.extract_strided_slice %0 {offsets = [0, 16], sizes = [8, 4], strides = [1, 1]} : vector<8x36xbf16> to vector<8x4xbf16>
    %cst_15 = arith.constant dense<0.000000e+00> : vector<8x286xf32>
    %23 = tpu.matmul %22, %21, %cst_15 {dimension_numbers = #tpu.dot_dimension_numbers<[1], [0], [0], [1], [0, 0, 1, 1], [], []>} : vector<8x4xbf16>, vector<4x286xbf16>, vector<8x286xf32> -> vector<8x286xf32>
    %24 = arith.addf %19, %23 : vector<8x286xf32>
    %c0_16 = arith.constant 0 : index
    %c0_17 = arith.constant 0 : index
    %c20 = arith.constant 20 : index
    %25 = vector.load %arg1[%c0_16, %c0_17, %c20] : memref<1x4x324xbf16, #tpu.memory_space<vmem>>, vector<1x4x286xbf16>
    %26 = vector.shape_cast %25 : vector<1x4x286xbf16> to vector<4x286xbf16>
    %27 = vector.extract_strided_slice %0 {offsets = [0, 20], sizes = [8, 4], strides = [1, 1]} : vector<8x36xbf16> to vector<8x4xbf16>
    %cst_18 = arith.constant dense<0.000000e+00> : vector<8x286xf32>
    %28 = tpu.matmul %27, %26, %cst_18 {dimension_numbers = #tpu.dot_dimension_numbers<[1], [0], [0], [1], [0, 0, 1, 1], [], []>} : vector<8x4xbf16>, vector<4x286xbf16>, vector<8x286xf32> -> vector<8x286xf32>
    %29 = arith.addf %24, %28 : vector<8x286xf32>
    %c0_19 = arith.constant 0 : index
    %c0_20 = arith.constant 0 : index
    %c36 = arith.constant 36 : index
    %30 = vector.load %arg1[%c0_19, %c0_20, %c36] : memref<1x4x324xbf16, #tpu.memory_space<vmem>>, vector<1x4x286xbf16>
    %31 = vector.shape_cast %30 : vector<1x4x286xbf16> to vector<4x286xbf16>
    %32 = vector.extract_strided_slice %0 {offsets = [0, 24], sizes = [8, 4], strides = [1, 1]} : vector<8x36xbf16> to vector<8x4xbf16>
    %cst_21 = arith.constant dense<0.000000e+00> : vector<8x286xf32>
    %33 = tpu.matmul %32, %31, %cst_21 {dimension_numbers = #tpu.dot_dimension_numbers<[1], [0], [0], [1], [0, 0, 1, 1], [], []>} : vector<8x4xbf16>, vector<4x286xbf16>, vector<8x286xf32> -> vector<8x286xf32>
    %34 = arith.addf %29, %33 : vector<8x286xf32>
    %c0_22 = arith.constant 0 : index
    %c0_23 = arith.constant 0 : index
    %c37 = arith.constant 37 : index
    %35 = vector.load %arg1[%c0_22, %c0_23, %c37] : memref<1x4x324xbf16, #tpu.memory_space<vmem>>, vector<1x4x286xbf16>
    %36 = vector.shape_cast %35 : vector<1x4x286xbf16> to vector<4x286xbf16>
    %37 = vector.extract_strided_slice %0 {offsets = [0, 28], sizes = [8, 4], strides = [1, 1]} : vector<8x36xbf16> to vector<8x4xbf16>
    %cst_24 = arith.constant dense<0.000000e+00> : vector<8x286xf32>
    %38 = tpu.matmul %37, %36, %cst_24 {dimension_numbers = #tpu.dot_dimension_numbers<[1], [0], [0], [1], [0, 0, 1, 1], [], []>} : vector<8x4xbf16>, vector<4x286xbf16>, vector<8x286xf32> -> vector<8x286xf32>
    %39 = arith.addf %34, %38 : vector<8x286xf32>
    %c0_25 = arith.constant 0 : index
    %c0_26 = arith.constant 0 : index
    %c38 = arith.constant 38 : index
    %40 = vector.load %arg1[%c0_25, %c0_26, %c38] : memref<1x4x324xbf16, #tpu.memory_space<vmem>>, vector<1x4x286xbf16>
    %41 = vector.shape_cast %40 : vector<1x4x286xbf16> to vector<4x286xbf16>
    %42 = vector.extract_strided_slice %0 {offsets = [0, 32], sizes = [8, 4], strides = [1, 1]} : vector<8x36xbf16> to vector<8x4xbf16>
    %cst_27 = arith.constant dense<0.000000e+00> : vector<8x286xf32>
    %43 = tpu.matmul %42, %41, %cst_27 {dimension_numbers = #tpu.dot_dimension_numbers<[1], [0], [0], [1], [0, 0, 1, 1], [], []>} : vector<8x4xbf16>, vector<4x286xbf16>, vector<8x286xf32> -> vector<8x286xf32>
    %44 = arith.addf %39, %43 : vector<8x286xf32>
    %c0_28 = arith.constant 0 : index
    %c0_29 = arith.constant 0 : index
    %45 = vector.load %arg3[%c0_28, %c0_29] : memref<8x1xf32, #tpu.memory_space<vmem>>, vector<8x1xf32>
    %46 = vector.broadcast %45 : vector<8x1xf32> to vector<8x286xf32>
    %47 = arith.addf %44, %46 : vector<8x286xf32>
    %cst_30 = arith.constant 0.000000e+00 : f32
    %48 = vector.broadcast %cst_30 : f32 to vector<8x286xf32>
    %49 = arith.cmpf oge, %47, %48 : vector<8x286xf32>
    %cst_31 = arith.constant 2.000000e-01 : f32
    %50 = vector.broadcast %cst_31 : f32 to vector<8x286xf32>
    %51 = arith.mulf %50, %47 : vector<8x286xf32>
    %52 = arith.select %49, %47, %51 : vector<8x286xi1>, vector<8x286xf32>
    %53 = vector.extract_strided_slice %52 {offsets = [0, 0], sizes = [8, 16], strides = [1, 1]} : vector<8x286xf32> to vector<8x16xf32>
    %c0_32 = arith.constant 0 : index
    %c0_33 = arith.constant 0 : index
    %c0_34 = arith.constant 0 : index
    %54 = vector.load %arg4[%c0_32, %c0_33, %c0_34] : memref<1x8x256xf32, #tpu.memory_space<vmem>>, vector<1x8x16xf32>
    %55 = vector.shape_cast %54 : vector<1x8x16xf32> to vector<8x16xf32>
    %56 = vector.shape_cast %53 : vector<8x16xf32> to vector<1x8x16xf32>
    tpu.vector_store %arg4[%c0_32, %c0_33, %c0_34], %56 {strides = array<i32>} : memref<1x8x256xf32, #tpu.memory_space<vmem>>, vector<1x8x16xf32>,
    %57 = vector.extract_strided_slice %52 {offsets = [0, 18], sizes = [8, 16], strides = [1, 1]} : vector<8x286xf32> to vector<8x16xf32>
    %c0_35 = arith.constant 0 : index
    %c0_36 = arith.constant 0 : index
    %c16 = arith.constant 16 : index
    %58 = vector.load %arg4[%c0_35, %c0_36, %c16] : memref<1x8x256xf32, #tpu.memory_space<vmem>>, vector<1x8x16xf32>
    %59 = vector.shape_cast %58 : vector<1x8x16xf32> to vector<8x16xf32>
    %60 = vector.shape_cast %57 : vector<8x16xf32> to vector<1x8x16xf32>
    tpu.vector_store %arg4[%c0_35, %c0_36, %c16], %60 {strides = array<i32>} : memref<1x8x256xf32, #tpu.memory_space<vmem>>, vector<1x8x16xf32>,
    %61 = vector.extract_strided_slice %52 {offsets = [0, 36], sizes = [8, 16], strides = [1, 1]} : vector<8x286xf32> to vector<8x16xf32>
    %c0_37 = arith.constant 0 : index
    %c0_38 = arith.constant 0 : index
    %c32 = arith.constant 32 : index
    %62 = vector.load %arg4[%c0_37, %c0_38, %c32] : memref<1x8x256xf32, #tpu.memory_space<vmem>>, vector<1x8x16xf32>
    %63 = vector.shape_cast %62 : vector<1x8x16xf32> to vector<8x16xf32>
    %64 = vector.shape_cast %61 : vector<8x16xf32> to vector<1x8x16xf32>
    tpu.vector_store %arg4[%c0_37, %c0_38, %c32], %64 {strides = array<i32>} : memref<1x8x256xf32, #tpu.memory_space<vmem>>, vector<1x8x16xf32>,
    %65 = vector.extract_strided_slice %52 {offsets = [0, 54], sizes = [8, 16], strides = [1, 1]} : vector<8x286xf32> to vector<8x16xf32>
    %c0_39 = arith.constant 0 : index
    %c0_40 = arith.constant 0 : index
    %c48 = arith.constant 48 : index
    %66 = vector.load %arg4[%c0_39, %c0_40, %c48] : memref<1x8x256xf32, #tpu.memory_space<vmem>>, vector<1x8x16xf32>
    %67 = vector.shape_cast %66 : vector<1x8x16xf32> to vector<8x16xf32>
    %68 = vector.shape_cast %65 : vector<8x16xf32> to vector<1x8x16xf32>
    tpu.vector_store %arg4[%c0_39, %c0_40, %c48], %68 {strides = array<i32>} : memref<1x8x256xf32, #tpu.memory_space<vmem>>, vector<1x8x16xf32>,
    %69 = vector.extract_strided_slice %52 {offsets = [0, 72], sizes = [8, 16], strides = [1, 1]} : vector<8x286xf32> to vector<8x16xf32>
    %c0_41 = arith.constant 0 : index
    %c0_42 = arith.constant 0 : index
    %c64 = arith.constant 64 : index
    %70 = vector.load %arg4[%c0_41, %c0_42, %c64] : memref<1x8x256xf32, #tpu.memory_space<vmem>>, vector<1x8x16xf32>
    %71 = vector.shape_cast %70 : vector<1x8x16xf32> to vector<8x16xf32>
    %72 = vector.shape_cast %69 : vector<8x16xf32> to vector<1x8x16xf32>
    tpu.vector_store %arg4[%c0_41, %c0_42, %c64], %72 {strides = array<i32>} : memref<1x8x256xf32, #tpu.memory_space<vmem>>, vector<1x8x16xf32>,
    %73 = vector.extract_strided_slice %52 {offsets = [0, 90], sizes = [8, 16], strides = [1, 1]} : vector<8x286xf32> to vector<8x16xf32>
    %c0_43 = arith.constant 0 : index
    %c0_44 = arith.constant 0 : index
    %c80 = arith.constant 80 : index
    %74 = vector.load %arg4[%c0_43, %c0_44, %c80] : memref<1x8x256xf32, #tpu.memory_space<vmem>>, vector<1x8x16xf32>
    %75 = vector.shape_cast %74 : vector<1x8x16xf32> to vector<8x16xf32>
    %76 = vector.shape_cast %73 : vector<8x16xf32> to vector<1x8x16xf32>
    tpu.vector_store %arg4[%c0_43, %c0_44, %c80], %76 {strides = array<i32>} : memref<1x8x256xf32, #tpu.memory_space<vmem>>, vector<1x8x16xf32>,
    %77 = vector.extract_strided_slice %52 {offsets = [0, 108], sizes = [8, 16], strides = [1, 1]} : vector<8x286xf32> to vector<8x16xf32>
    %c0_45 = arith.constant 0 : index
    %c0_46 = arith.constant 0 : index
    %c96 = arith.constant 96 : index
    %78 = vector.load %arg4[%c0_45, %c0_46, %c96] : memref<1x8x256xf32, #tpu.memory_space<vmem>>, vector<1x8x16xf32>
    %79 = vector.shape_cast %78 : vector<1x8x16xf32> to vector<8x16xf32>
    %80 = vector.shape_cast %77 : vector<8x16xf32> to vector<1x8x16xf32>
    tpu.vector_store %arg4[%c0_45, %c0_46, %c96], %80 {strides = array<i32>} : memref<1x8x256xf32, #tpu.memory_space<vmem>>, vector<1x8x16xf32>,
    %81 = vector.extract_strided_slice %52 {offsets = [0, 126], sizes = [8, 16], strides = [1, 1]} : vector<8x286xf32> to vector<8x16xf32>
    %c0_47 = arith.constant 0 : index
    %c0_48 = arith.constant 0 : index
    %c112 = arith.constant 112 : index
    %82 = vector.load %arg4[%c0_47, %c0_48, %c112] : memref<1x8x256xf32, #tpu.memory_space<vmem>>, vector<1x8x16xf32>
    %83 = vector.shape_cast %82 : vector<1x8x16xf32> to vector<8x16xf32>
    %84 = vector.shape_cast %81 : vector<8x16xf32> to vector<1x8x16xf32>
    tpu.vector_store %arg4[%c0_47, %c0_48, %c112], %84 {strides = array<i32>} : memref<1x8x256xf32, #tpu.memory_space<vmem>>, vector<1x8x16xf32>,
    %85 = vector.extract_strided_slice %52 {offsets = [0, 144], sizes = [8, 16], strides = [1, 1]} : vector<8x286xf32> to vector<8x16xf32>
    %c0_49 = arith.constant 0 : index
    %c0_50 = arith.constant 0 : index
    %c128 = arith.constant 128 : index
    %86 = vector.load %arg4[%c0_49, %c0_50, %c128] : memref<1x8x256xf32, #tpu.memory_space<vmem>>, vector<1x8x16xf32>
    %87 = vector.shape_cast %86 : vector<1x8x16xf32> to vector<8x16xf32>
    %88 = vector.shape_cast %85 : vector<8x16xf32> to vector<1x8x16xf32>
    tpu.vector_store %arg4[%c0_49, %c0_50, %c128], %88 {strides = array<i32>} : memref<1x8x256xf32, #tpu.memory_space<vmem>>, vector<1x8x16xf32>,
    %89 = vector.extract_strided_slice %52 {offsets = [0, 162], sizes = [8, 16], strides = [1, 1]} : vector<8x286xf32> to vector<8x16xf32>
    %c0_51 = arith.constant 0 : index
    %c0_52 = arith.constant 0 : index
    %c144 = arith.constant 144 : index
    %90 = vector.load %arg4[%c0_51, %c0_52, %c144] : memref<1x8x256xf32, #tpu.memory_space<vmem>>, vector<1x8x16xf32>
    %91 = vector.shape_cast %90 : vector<1x8x16xf32> to vector<8x16xf32>
    %92 = vector.shape_cast %89 : vector<8x16xf32> to vector<1x8x16xf32>
    tpu.vector_store %arg4[%c0_51, %c0_52, %c144], %92 {strides = array<i32>} : memref<1x8x256xf32, #tpu.memory_space<vmem>>, vector<1x8x16xf32>,
    %93 = vector.extract_strided_slice %52 {offsets = [0, 180], sizes = [8, 16], strides = [1, 1]} : vector<8x286xf32> to vector<8x16xf32>
    %c0_53 = arith.constant 0 : index
    %c0_54 = arith.constant 0 : index
    %c160 = arith.constant 160 : index
    %94 = vector.load %arg4[%c0_53, %c0_54, %c160] : memref<1x8x256xf32, #tpu.memory_space<vmem>>, vector<1x8x16xf32>
    %95 = vector.shape_cast %94 : vector<1x8x16xf32> to vector<8x16xf32>
    %96 = vector.shape_cast %93 : vector<8x16xf32> to vector<1x8x16xf32>
    tpu.vector_store %arg4[%c0_53, %c0_54, %c160], %96 {strides = array<i32>} : memref<1x8x256xf32, #tpu.memory_space<vmem>>, vector<1x8x16xf32>,
    %97 = vector.extract_strided_slice %52 {offsets = [0, 198], sizes = [8, 16], strides = [1, 1]} : vector<8x286xf32> to vector<8x16xf32>
    %c0_55 = arith.constant 0 : index
    %c0_56 = arith.constant 0 : index
    %c176 = arith.constant 176 : index
    %98 = vector.load %arg4[%c0_55, %c0_56, %c176] : memref<1x8x256xf32, #tpu.memory_space<vmem>>, vector<1x8x16xf32>
    %99 = vector.shape_cast %98 : vector<1x8x16xf32> to vector<8x16xf32>
    %100 = vector.shape_cast %97 : vector<8x16xf32> to vector<1x8x16xf32>
    tpu.vector_store %arg4[%c0_55, %c0_56, %c176], %100 {strides = array<i32>} : memref<1x8x256xf32, #tpu.memory_space<vmem>>, vector<1x8x16xf32>,
    %101 = vector.extract_strided_slice %52 {offsets = [0, 216], sizes = [8, 16], strides = [1, 1]} : vector<8x286xf32> to vector<8x16xf32>
    %c0_57 = arith.constant 0 : index
    %c0_58 = arith.constant 0 : index
    %c192 = arith.constant 192 : index
    %102 = vector.load %arg4[%c0_57, %c0_58, %c192] : memref<1x8x256xf32, #tpu.memory_space<vmem>>, vector<1x8x16xf32>
    %103 = vector.shape_cast %102 : vector<1x8x16xf32> to vector<8x16xf32>
    %104 = vector.shape_cast %101 : vector<8x16xf32> to vector<1x8x16xf32>
    tpu.vector_store %arg4[%c0_57, %c0_58, %c192], %104 {strides = array<i32>} : memref<1x8x256xf32, #tpu.memory_space<vmem>>, vector<1x8x16xf32>,
    %105 = vector.extract_strided_slice %52 {offsets = [0, 234], sizes = [8, 16], strides = [1, 1]} : vector<8x286xf32> to vector<8x16xf32>
    %c0_59 = arith.constant 0 : index
    %c0_60 = arith.constant 0 : index
    %c208 = arith.constant 208 : index
    %106 = vector.load %arg4[%c0_59, %c0_60, %c208] : memref<1x8x256xf32, #tpu.memory_space<vmem>>, vector<1x8x16xf32>
    %107 = vector.shape_cast %106 : vector<1x8x16xf32> to vector<8x16xf32>
    %108 = vector.shape_cast %105 : vector<8x16xf32> to vector<1x8x16xf32>
    tpu.vector_store %arg4[%c0_59, %c0_60, %c208], %108 {strides = array<i32>} : memref<1x8x256xf32, #tpu.memory_space<vmem>>, vector<1x8x16xf32>,
    %109 = vector.extract_strided_slice %52 {offsets = [0, 252], sizes = [8, 16], strides = [1, 1]} : vector<8x286xf32> to vector<8x16xf32>
    %c0_61 = arith.constant 0 : index
    %c0_62 = arith.constant 0 : index
    %c224 = arith.constant 224 : index
    %110 = vector.load %arg4[%c0_61, %c0_62, %c224] : memref<1x8x256xf32, #tpu.memory_space<vmem>>, vector<1x8x16xf32>
    %111 = vector.shape_cast %110 : vector<1x8x16xf32> to vector<8x16xf32>
    %112 = vector.shape_cast %109 : vector<8x16xf32> to vector<1x8x16xf32>
    tpu.vector_store %arg4[%c0_61, %c0_62, %c224], %112 {strides = array<i32>} : memref<1x8x256xf32, #tpu.memory_space<vmem>>, vector<1x8x16xf32>,
    %113 = vector.extract_strided_slice %52 {offsets = [0, 270], sizes = [8, 16], strides = [1, 1]} : vector<8x286xf32> to vector<8x16xf32>
    %c0_63 = arith.constant 0 : index
    %c0_64 = arith.constant 0 : index
    %c240 = arith.constant 240 : index
    %114 = vector.load %arg4[%c0_63, %c0_64, %c240] : memref<1x8x256xf32, #tpu.memory_space<vmem>>, vector<1x8x16xf32>
    %115 = vector.shape_cast %114 : vector<1x8x16xf32> to vector<8x16xf32>
    %116 = vector.shape_cast %113 : vector<8x16xf32> to vector<1x8x16xf32>
    tpu.vector_store %arg4[%c0_63, %c0_64, %c240], %116 {strides = array<i32>} : memref<1x8x256xf32, #tpu.memory_space<vmem>>, vector<1x8x16xf32>,
    return
  }
  func.func @transform_0(%arg0: i32) -> (i32, i32, i32) {
    %c0_i32 = arith.constant 0 : i32
    %c0_i32_0 = arith.constant 0 : i32
    %c0_i32_1 = arith.constant 0 : i32
    return %arg0, %c0_i32, %c0_i32_0 : i32, i32, i32
  }
  func.func @transform_1(%arg0: i32) -> (i32, i32) {
    %c0_i32 = arith.constant 0 : i32
    %c0_i32_0 = arith.constant 0 : i32
    %c0_i32_1 = arith.constant 0 : i32
    return %c0_i32, %c0_i32_0 : i32, i32
  }
  func.func @transform_2(%arg0: i32) -> (i32, i32) {
    %c0_i32 = arith.constant 0 : i32
    %c0_i32_0 = arith.constant 0 : i32
    %c0_i32_1 = arith.constant 0 : i32
    return %c0_i32, %c0_i32_0 : i32, i32
  }
  func.func @transform_3(%arg0: i32) -> (i32, i32, i32) {
    %c0_i32 = arith.constant 0 : i32
    %c0_i32_0 = arith.constant 0 : i32
    %c0_i32_1 = arith.constant 0 : i32
    return %arg0, %c0_i32, %c0_i32_0 : i32, i32, i32
  }
}

</mosaic_0001>

<llo_original>
// kernel: tpu_custom_call.1
$region0: #{tpu_custom_call.1}
  #allocation0 [shape = 'u32[]', space=smem, size = 0x4, offset = 0x4, fixed_abs, tag = 'smem constant byte address 0x4 - core index']
  #allocation1 [shape = 'u32[144,128]{1,0:T(1,128)}', space=vmem, size = 0x12000, scoped, tag = 'internal scratch']
  %s0 = inlined_call_operand.hbm [shape: bf16[2,4,324], index: 0, kind: input, shape index: {}]
  %s1 = inlined_call_operand.vmem [shape: bf16[8,36], index: 1, kind: input, shape index: {}]
  %s2 = inlined_call_operand.vmem [shape: f32[8,1], index: 2, kind: input, shape index: {}]
  %s3 = inlined_call_operand.hbm [shape: f32[2,8,256], index: 3, kind: output, shape index: {}]
  %s4 = sld [smem:[#allocation0]]
  $region49: #{tpu_custom_call.1} parent=0
    _
  %s6 = ssub.s32 1, %s4
  %s7 = scalar_select 0, %s6, %s4
  $region1: #{tpu_custom_call.1} parent=0
    #allocation2 [shape = 'u8[6144]{0}', space=vmem, size = 0x1800, scoped, tag = 'input window, operand 0']
    #allocation3 [shape = 's32[2]{0}', space=sflag, size = 0x8, scoped, tag = 'scoped memory for tpu_custom_call.1']
    #allocation4 [shape = 's32[2]{0}', space=sflag, size = 0x8, scoped, tag = 'scoped memory for tpu_custom_call.1']
    #allocation5 [shape = 'u8[16384]{0}', space=vmem, size = 0x4000, scoped, tag = 'output window, operand 0']
    %8 = vsyncpa [#allocation3], 0
    %s9 = scalar_lea.sflag [#allocation3], 1
    %10 = vsyncpa %s9, 0
    %11 = vsyncpa [#allocation4], 0
    %s12 = scalar_lea.sflag [#allocation4], 1
    %13 = vsyncpa %s12, 0
    loop: start=0, step=1, limit=4
    $region2: #{tpu_custom_call.1} parent=1 // loop_pre_header
      _
    $region3: #{tpu_custom_call.1} parent=1 // loop_header
      %s15 = sphi 0, %s19
      %p16 = scmp.ge.s32.totalorder %s15, 4
      %s25 = sphi 0, %s27
      %s28 = sphi 0, %s25
      %s29 = sphi 0, %s28
      %s45 = sphi 0, %s29
      %s49 = sphi 0, %s49
      %s51 = sphi 0, %s49
      %s52 = sphi 0, %s51
      %s66 = sphi 0, %s52
      %s70 = sphi 0, %s70
      %s72 = sphi 0, %s70
      %s73 = sphi 0, %s72
      %s87 = sphi 0, %s73
      %s93 = sphi 0, %s95
      %s96 = sphi 0, %s93
      %s97 = sphi 0, %s96
      %s113 = sphi 0, %s97
    $region4: #{tpu_custom_call.1} parent=1 // loop_header_branch
      %18 = sbr.rel (%p16) target = $region8
    $region5: #{tpu_custom_call.1} parent=1 // loop_body
      %s20 = ssub.s32 %s15, 1
      %s21 = ssub.s32 %s15, 2
      %s22 = sadd.s32 %s15, 1
      %s23 = ssub.s32 %s15, %s22
      %p24 = scmp.eq.s32.totalorder %s23, 0
      %s26 = sadd.s32 %s25, 1
      %s27 = scalar_select %p24, %s25, %s26
      %p30 = pneg %p24
      %p31 = scmp.eq.s32.totalorder %s15, 1
      %p32 = por %p30, %p31
      %p33 = scmp.ne.s32.totalorder %s25, %s28
      %p34 = scmp.eq.s32.totalorder %s15, 0
      %p35 = por %p33, %p34
      %p36 = scmp.ne.s32.totalorder %s25, %s28
      %p37 = scmp.eq.s32.totalorder %s20, 1
      %p38 = por %p36, %p37
      %p39 = scmp.ne.s32.totalorder %s28, %s29
      %p40 = scmp.eq.s32.totalorder %s20, 0
      %p41 = por %p39, %p40
      %p42 = scmp.ne.s32.totalorder %s28, %s29
      %p43 = scmp.eq.s32.totalorder %s21, 1
      %p44 = por %p42, %p43
      %p46 = scmp.ne.s32.totalorder %s29, %s45
      %p47 = scmp.eq.s32.totalorder %s21, 0
      %p48 = por %p46, %p47
      %s50 = sadd.s32 %s49, 1
      %p53 = scmp.eq.s32.totalorder %s15, 1
      %p54 = scmp.ne.s32.totalorder %s49, %s51
      %p55 = scmp.eq.s32.totalorder %s15, 0
      %p56 = por %p54, %p55
      %p57 = scmp.ne.s32.totalorder %s49, %s51
      %p58 = scmp.eq.s32.totalorder %s20, 1
      %p59 = por %p57, %p58
      %p60 = scmp.ne.s32.totalorder %s51, %s52
      %p61 = scmp.eq.s32.totalorder %s20, 0
      %p62 = por %p60, %p61
      %p63 = scmp.ne.s32.totalorder %s51, %s52
      %p64 = scmp.eq.s32.totalorder %s21, 1
      %p65 = por %p63, %p64
      %p67 = scmp.ne.s32.totalorder %s52, %s66
      %p68 = scmp.eq.s32.totalorder %s21, 0
      %p69 = por %p67, %p68
      %s71 = sadd.s32 %s70, 1
      %p74 = scmp.eq.s32.totalorder %s15, 1
      %p75 = scmp.ne.s32.totalorder %s70, %s72
      %p76 = scmp.eq.s32.totalorder %s15, 0
      %p77 = por %p75, %p76
      %p78 = scmp.ne.s32.totalorder %s70, %s72
      %p79 = scmp.eq.s32.totalorder %s20, 1
      %p80 = por %p78, %p79
      %p81 = scmp.ne.s32.totalorder %s72, %s73
      %p82 = scmp.eq.s32.totalorder %s20, 0
      %p83 = por %p81, %p82
      %p84 = scmp.ne.s32.totalorder %s72, %s73
      %p85 = scmp.eq.s32.totalorder %s21, 1
      %p86 = por %p84, %p85
      %p88 = scmp.ne.s32.totalorder %s73, %s87
      %p89 = scmp.eq.s32.totalorder %s21, 0
      %p90 = por %p88, %p89
      %s91 = ssub.s32 %s15, %s22
      %p92 = scmp.eq.s32.totalorder %s91, 0
      %s94 = sadd.s32 %s93, 1
      %s95 = scalar_select %p92, %s93, %s94
      %p98 = pneg %p92
      %p99 = scmp.eq.s32.totalorder %s15, 1
      %p100 = por %p98, %p99
      %p101 = scmp.ne.s32.totalorder %s93, %s96
      %p102 = scmp.eq.s32.totalorder %s15, 0
      %p103 = por %p101, %p102
      %p104 = scmp.ne.s32.totalorder %s93, %s96
      %p105 = scmp.eq.s32.totalorder %s20, 1
      %p106 = por %p104, %p105
      %p107 = scmp.ne.s32.totalorder %s96, %s97
      %p108 = scmp.eq.s32.totalorder %s20, 0
      %p109 = por %p107, %p108
      %p110 = scmp.ne.s32.totalorder %s96, %s97
      %p111 = scmp.eq.s32.totalorder %s21, 1
      %p112 = por %p110, %p111
      %p114 = scmp.ne.s32.totalorder %s97, %s113
      %p115 = scmp.eq.s32.totalorder %s21, 0
      %p116 = por %p114, %p115
      %p117 = scmp.le.s32.totalorder 1, %s15
      %p118 = scmp.lt.s32.totalorder %s15, 3
      %p119 = pnand %p117, %p118
      %p120 = pneg %p119
      // Predicated region
      $region9: #{tpu_custom_call.1} parent=5 // pred_check
        _
      $region10: #{tpu_custom_call.1} parent=5 // pred_check_branch
        %122 = sbr.rel (%p119) target = $region12
      $region11: #{tpu_custom_call.1} parent=5 // pred_region
        %s123 = ssub.s32 %s15, 1
        // Predicated region
        $region13: #{tpu_custom_call.1} parent=11 // pred_check
          %p124 = pneg %p62
        $region14: #{tpu_custom_call.1} parent=11 // pred_check_branch
          %126 = sbr.rel (%p124) target = $region16
        $region15: #{tpu_custom_call.1} parent=11 // pred_region
          _
        $region16: #{tpu_custom_call.1} parent=11 // pred_fallthru
          _
        // Predicated region
        $region17: #{tpu_custom_call.1} parent=11 // pred_check
          %p127 = pneg %p83
        $region18: #{tpu_custom_call.1} parent=11 // pred_check_branch
          %129 = sbr.rel (%p127) target = $region20
        $region19: #{tpu_custom_call.1} parent=11 // pred_region
          _
        $region20: #{tpu_custom_call.1} parent=11 // pred_fallthru
          _
      $region12: #{tpu_custom_call.1} parent=5 // pred_fallthru
        _
      %p130 = scmp.lt.s32.totalorder %s15, 2
      // Predicated region
      $region21: #{tpu_custom_call.1} parent=5 // pred_check
        %p131 = pneg %p130
      $region22: #{tpu_custom_call.1} parent=5 // pred_check_branch
        %133 = sbr.rel (%p131) target = $region24
      $region23: #{tpu_custom_call.1} parent=5 // pred_region
        // Predicated region
        $region25: #{tpu_custom_call.1} parent=23 // pred_check
          %p134 = pneg %p35
        $region26: #{tpu_custom_call.1} parent=23 // pred_check_branch
          %136 = sbr.rel (%p134) target = $region28
        $region27: #{tpu_custom_call.1} parent=23 // pred_region
          %s137 = sand.u32 %s25, 1
          %s138 = scalar_lea.sflag [#allocation3], %s137
          %s139 = sand.u32 %s25, 1
          %s140 = smul.addr %s139, 6
          %s141 = scalar_lea.vmem [#allocation2], %s140
          %s143 = ssub.s32 96, 96
          %144 = vsyncadd %s138, %s143
          %s145 = smul.addr %s15, 3
          %s146 = smul.addr %s145, 32
          %s147 = scalar_lea.hbm %s0, %s146
          %s149 = sshll.u32 %s141, 4
          %s150 = int_to_ptr.vmem [resolvable:$true] %s149
          %152 = dma.hbm_to_vmem [thread:$0]  %s147, 96, %s150, %s138
        $region28: #{tpu_custom_call.1} parent=23 // pred_fallthru
          _
      $region24: #{tpu_custom_call.1} parent=5 // pred_fallthru
        _
      %p153 = scmp.le.s32.totalorder 1, %s15
      %p154 = scmp.lt.s32.totalorder %s15, 3
      %p155 = pnand %p153, %p154
      %p156 = pneg %p155
      // Predicated region
      $region29: #{tpu_custom_call.1} parent=5 // pred_check
        _
      $region30: #{tpu_custom_call.1} parent=5 // pred_check_branch
        %158 = sbr.rel (%p155) target = $region32
      $region31: #{tpu_custom_call.1} parent=5 // pred_region
        %s159 = ssub.s32 %s15, 1
        %s160 = sand.u32 %s28, 1
        %s161 = scalar_lea.sflag [#allocation3], %s160
        %s162 = sand.u32 %s28, 1
        %s163 = smul.addr %s162, 6
        %s164 = scalar_lea.vmem [#allocation2], %s163
        // Predicated region
        $region33: #{tpu_custom_call.1} parent=31 // pred_check
          %p165 = pneg %p41
        $region34: #{tpu_custom_call.1} parent=31 // pred_check_branch
          %167 = sbr.rel (%p165) target = $region36
        $region35: #{tpu_custom_call.1} parent=31 // pred_region
          %168 = dma.done %s161, 96
        $region36: #{tpu_custom_call.1} parent=31 // pred_fallthru
          _
        %s169 = sand.u32 %s28, 1
        %s170 = scalar_lea.sflag [#allocation3], %s169
        %s171 = sand.u32 %s28, 1
        %s172 = smul.addr %s171, 6
        %s173 = scalar_lea.vmem [#allocation2], %s172
        %p174 = pneg %p41
        %p175 = pneg %p38
        %p176 = pneg %p62
        %p177 = pneg %p59
        %p178 = pneg %p83
        %p179 = pneg %p80
        %p180 = pneg %p109
        %p181 = pneg %p106
        %s182 = sand.u32 %s96, 1
        %s183 = scalar_lea.sflag [#allocation4], %s182
        %s184 = sand.u32 %s96, 1
        %s185 = smul.addr %s184, 16
        %s186 = scalar_lea.vmem [#allocation5], %s185
        %v188 = vld [vmem:[%s1] sm:$0xf]
        %v189 = vld [vmem:[%s164] sm:$0x3f]
        %v191 = vunpack.c.l.b16 %v188
        %v192 = vpack.c.b16 %v191, %v191
        %193 = vrot.lane.b32.xlu0 %v192, 124
        %v194 = vpop.permute.xlu0 %193
        %v196 = vcombine.high %v189, %v189
        %v198 = vunpack.c.l.s4 1983009808
        %v199 = vunpack.c.0.s8 %v198
        %v200 = vlaneseq
        %v201 = vshrl.u32 %v200, 7
        %v202 = vsub.s32 %v199, %v201
        %v203 = vrot.slane %v189, %v202
        %v205 = vunpack.c.l.s4 1983009808
        %v206 = vunpack.c.0.s8 %v205
        %v207 = vlaneseq
        %v208 = vshrl.u32 %v207, 7
        %v209 = vsub.s32 %v206, %v208
        %v210 = vrot.slane %v196, %v209
        %v211 = vcombine.high %v203, %v203
        %212 = vrot.lane.b32.xlu0 %v203, 127
        %v213 = vpop.permute.xlu0 %212
        %214 = vrot.lane.b32.xlu0 %v211, 127
        %v215 = vpop.permute.xlu0 %214
        %216 = vrot.lane.b32.xlu0 %v210, 127
        %v217 = vpop.permute.xlu0 %216
        %vm218 = vcmask 1039360
        %v219 = vsel %vm218, %v213, %v215
        %v220 = vsel %vm218, %v215, %v217
        %vm221 = vcmask 31744
        %v223 = vsel %vm221, %v194, 0
        %vm225 = vcmask 1041408
        %v227 = vsel %vm225, %v219, 0
        %v230 = vsel %vm225, %v220, 0
        %v233 = vsel %vm225, %v217, 0
        %235 = vmatprep.subr.bf16.mxu0 %v230
        %236 = vmatpush1.bf16.msra.mxu0 %v227
        %237 = vmatprep.subr.bf16.mxu0 0
        %238 = vmatpush1.bf16.msra.mxu0 0
        %239 = vmatprep.subr.bf16.mxu0 0
        %240 = vmatpush1.bf16.msra.mxu0 0
        %241 = vmatprep.subr.bf16.mxu0 0
        %242 = vmatpush1.bf16.msra.mxu0 0
        %243 = vmatprep.subr.bf16.mxu0 0
        %244 = vmatpush1.bf16.msra.mxu0 0
        %245 = vmatprep.subr.bf16.mxu0 0
        %246 = vmatpush1.bf16.msra.mxu0 0
        %247 = vmatprep.subr.bf16.mxu0 0
        %248 = vmatpush1.bf16.msra.mxu0 0
        %249 = vmatprep.subr.bf16.mxu0 0
        %250 = vmatpush1.bf16.msra.mxu0 0
        %251 = vmatprep.subr.bf16.mxu0 0
        %252 = vmatpush1.bf16.msra.mxu0 0
        %253 = vmatprep.subr.bf16.mxu0 0
        %254 = vmatpush1.bf16.msra.mxu0 0
        %255 = vmatprep.subr.bf16.mxu0 0
        %256 = vmatpush1.bf16.msra.mxu0 0
        %257 = vmatprep.subr.bf16.mxu0 0
        %258 = vmatpush1.bf16.msra.mxu0 0
        %259 = vmatprep.subr.bf16.mxu0 0
        %260 = vmatpush1.bf16.msra.mxu0 0
        %261 = vmatprep.subr.bf16.mxu0 0
        %262 = vmatpush1.bf16.msra.mxu0 0
        %263 = vmatprep.subr.bf16.mxu0 0
        %264 = vmatpush1.bf16.msra.mxu0 0
        %265 = vmatprep.subr.bf16.mxu0 0
        %266 = vmatpush1.bf16.msra.mxu0 0
        %267 = vmatprep.mubr.bf16.mxu0 0
        %268 = vmatmul.mubr.bf16.gmra.mrb[0].mxu0 %v223
        %v269 = vpop.f32.mrb[0].mxu0
        %v270 = vadd.f32 0.0, %v269
        %v271 = vpop.f32.mrb[0].mxu0
        %v272 = vadd.f32 0.0, %v271
        %v273 = vpop.f32.mrb[0].mxu0
        %v274 = vpop.f32.mrb[0].mxu0
        %275 = vdwg.mxu0
        %276 = vmatprep.subr.bf16.mxu0 0
        %277 = vmatpush1.bf16.msra.mxu0 %v233
        %278 = vmatprep.subr.bf16.mxu0 0
        %279 = vmatpush1.bf16.msra.mxu0 0
        %280 = vmatprep.subr.bf16.mxu0 0
        %281 = vmatpush1.bf16.msra.mxu0 0
        %282 = vmatprep.subr.bf16.mxu0 0
        %283 = vmatpush1.bf16.msra.mxu0 0
        %284 = vmatprep.subr.bf16.mxu0 0
        %285 = vmatpush1.bf16.msra.mxu0 0
        %286 = vmatprep.subr.bf16.mxu0 0
        %287 = vmatpush1.bf16.msra.mxu0 0
        %288 = vmatprep.subr.bf16.mxu0 0
        %289 = vmatpush1.bf16.msra.mxu0 0
        %290 = vmatprep.subr.bf16.mxu0 0
        %291 = vmatpush1.bf16.msra.mxu0 0
        %292 = vmatprep.subr.bf16.mxu0 0
        %293 = vmatpush1.bf16.msra.mxu0 0
        %294 = vmatprep.subr.bf16.mxu0 0
        %295 = vmatpush1.bf16.msra.mxu0 0
        %296 = vmatprep.subr.bf16.mxu0 0
        %297 = vmatpush1.bf16.msra.mxu0 0
        %298 = vmatprep.subr.bf16.mxu0 0
        %299 = vmatpush1.bf16.msra.mxu0 0
        %300 = vmatprep.subr.bf16.mxu0 0
        %301 = vmatpush1.bf16.msra.mxu0 0
        %302 = vmatprep.subr.bf16.mxu0 0
        %303 = vmatpush1.bf16.msra.mxu0 0
        %304 = vmatprep.subr.bf16.mxu0 0
        %305 = vmatpush1.bf16.msra.mxu0 0
        %306 = vmatprep.subr.bf16.mxu0 0
        %307 = vmatpush1.bf16.msra.mxu0 0
        %308 = vmatprep.mubr.bf16.mxu0 0
        %309 = vmatmul.mubr.bf16.gmra.mrb[0].mxu0 %v223
        %v310 = vpop.f32.mrb[0].mxu0
        %v311 = vadd.f32 0.0, %v310
        %v312 = vpop.f32.mrb[0].mxu0
        %v313 = vpop.f32.mrb[0].mxu0
        %v314 = vpop.f32.mrb[0].mxu0
        %315 = vdwg.mxu0
        %v317 = vsel %vm221, %v188, 0
        %v320 = vsel %vm225, %v203, 0
        %v323 = vsel %vm225, %v211, 0
        %v326 = vsel %vm225, %v210, 0
        %328 = vmatprep.subr.bf16.mxu0 %v323
        %329 = vmatpush1.bf16.msra.mxu0 %v320
        %330 = vmatprep.subr.bf16.mxu0 0
        %331 = vmatpush1.bf16.msra.mxu0 0
        %332 = vmatprep.subr.bf16.mxu0 0
        %333 = vmatpush1.bf16.msra.mxu0 0
        %334 = vmatprep.subr.bf16.mxu0 0
        %335 = vmatpush1.bf16.msra.mxu0 0
        %336 = vmatprep.subr.bf16.mxu0 0
        %337 = vmatpush1.bf16.msra.mxu0 0
        %338 = vmatprep.subr.bf16.mxu0 0
        %339 = vmatpush1.bf16.msra.mxu0 0
        %340 = vmatprep.subr.bf16.mxu0 0
        %341 = vmatpush1.bf16.msra.mxu0 0
        %342 = vmatprep.subr.bf16.mxu0 0
        %343 = vmatpush1.bf16.msra.mxu0 0
        %344 = vmatprep.subr.bf16.mxu0 0
        %345 = vmatpush1.bf16.msra.mxu0 0
        %346 = vmatprep.subr.bf16.mxu0 0
        %347 = vmatpush1.bf16.msra.mxu0 0
        %348 = vmatprep.subr.bf16.mxu0 0
        %349 = vmatpush1.bf16.msra.mxu0 0
        %350 = vmatprep.subr.bf16.mxu0 0
        %351 = vmatpush1.bf16.msra.mxu0 0
        %352 = vmatprep.subr.bf16.mxu0 0
        %353 = vmatpush1.bf16.msra.mxu0 0
        %354 = vmatprep.subr.bf16.mxu0 0
        %355 = vmatpush1.bf16.msra.mxu0 0
        %356 = vmatprep.subr.bf16.mxu0 0
        %357 = vmatpush1.bf16.msra.mxu0 0
        %358 = vmatprep.subr.bf16.mxu0 0
        %359 = vmatpush1.bf16.msra.mxu0 0
        %360 = vmatprep.mubr.bf16.mxu0 0
        %361 = vmatmul.mubr.bf16.gmra.mrb[0].mxu0 %v317
        %v362 = vpop.f32.mrb[0].mxu0
        %v363 = vadd.f32 %v270, %v362
        %v364 = vpop.f32.mrb[0].mxu0
        %v365 = vadd.f32 %v272, %v364
        %v366 = vpop.f32.mrb[0].mxu0
        %v367 = vpop.f32.mrb[0].mxu0
        %368 = vdwg.mxu0
        %369 = vmatprep.subr.bf16.mxu0 0
        %370 = vmatpush1.bf16.msra.mxu0 %v326
        %371 = vmatprep.subr.bf16.mxu0 0
        %372 = vmatpush1.bf16.msra.mxu0 0
        %373 = vmatprep.subr.bf16.mxu0 0
        %374 = vmatpush1.bf16.msra.mxu0 0
        %375 = vmatprep.subr.bf16.mxu0 0
        %376 = vmatpush1.bf16.msra.mxu0 0
        %377 = vmatprep.subr.bf16.mxu0 0
        %378 = vmatpush1.bf16.msra.mxu0 0
        %379 = vmatprep.subr.bf16.mxu0 0
        %380 = vmatpush1.bf16.msra.mxu0 0
        %381 = vmatprep.subr.bf16.mxu0 0
        %382 = vmatpush1.bf16.msra.mxu0 0
        %383 = vmatprep.subr.bf16.mxu0 0
        %384 = vmatpush1.bf16.msra.mxu0 0
        %385 = vmatprep.subr.bf16.mxu0 0
        %386 = vmatpush1.bf16.msra.mxu0 0
        %387 = vmatprep.subr.bf16.mxu0 0
        %388 = vmatpush1.bf16.msra.mxu0 0
        %389 = vmatprep.subr.bf16.mxu0 0
        %390 = vmatpush1.bf16.msra.mxu0 0
        %391 = vmatprep.subr.bf16.mxu0 0
        %392 = vmatpush1.bf16.msra.mxu0 0
        %393 = vmatprep.subr.bf16.mxu0 0
        %394 = vmatpush1.bf16.msra.mxu0 0
        %395 = vmatprep.subr.bf16.mxu0 0
        %396 = vmatpush1.bf16.msra.mxu0 0
        %397 = vmatprep.subr.bf16.mxu0 0
        %398 = vmatpush1.bf16.msra.mxu0 0
        %399 = vmatprep.subr.bf16.mxu0 0
        %400 = vmatpush1.bf16.msra.mxu0 0
        %401 = vmatprep.mubr.bf16.mxu0 0
        %402 = vmatmul.mubr.bf16.gmra.mrb[0].mxu0 %v317
        %v403 = vpop.f32.mrb[0].mxu0
        %v404 = vadd.f32 %v311, %v403
        %v405 = vpop.f32.mrb[0].mxu0
        %v406 = vpop.f32.mrb[0].mxu0
        %v407 = vpop.f32.mrb[0].mxu0
        %408 = vdwg.mxu0
        %v409 = vld [vmem:[%s164] sm:$0x3f]
        %410 = vrot.lane.b32.xlu0 %v192, 120
        %v411 = vpop.permute.xlu0 %410
        %v413 = vcombine.high %v409, %v409
        %v415 = vunpack.c.l.s4 1983009808
        %v416 = vunpack.c.0.s8 %v415
        %v417 = vlaneseq
        %v418 = vshrl.u32 %v417, 7
        %v419 = vsub.s32 %v416, %v418
        %v420 = vrot.slane %v409, %v419
        %v422 = vunpack.c.l.s4 1983009808
        %v423 = vunpack.c.0.s8 %v422
        %v424 = vlaneseq
        %v425 = vshrl.u32 %v424, 7
        %v426 = vsub.s32 %v423, %v425
        %v427 = vrot.slane %v413, %v426
        %v428 = vcombine.high %v420, %v420
        %429 = vrot.lane.b32.xlu0 %v420, 126
        %v430 = vpop.permute.xlu0 %429
        %431 = vrot.lane.b32.xlu0 %v428, 126
        %v432 = vpop.permute.xlu0 %431
        %433 = vrot.lane.b32.xlu0 %v427, 126
        %v434 = vpop.permute.xlu0 %433
        %vm435 = vcmask 1031168
        %v436 = vsel %vm435, %v430, %v432
        %v437 = vsel %vm435, %v432, %v434
        %v439 = vsel %vm221, %v411, 0
        %v442 = vsel %vm225, %v436, 0
        %v445 = vsel %vm225, %v437, 0
        %v448 = vsel %vm225, %v434, 0
        %450 = vmatprep.subr.bf16.mxu0 %v445
        %451 = vmatpush1.bf16.msra.mxu0 %v442
        %452 = vmatprep.subr.bf16.mxu0 0
        %453 = vmatpush1.bf16.msra.mxu0 0
        %454 = vmatprep.subr.bf16.mxu0 0
        %455 = vmatpush1.bf16.msra.mxu0 0
        %456 = vmatprep.subr.bf16.mxu0 0
        %457 = vmatpush1.bf16.msra.mxu0 0
        %458 = vmatprep.subr.bf16.mxu0 0
        %459 = vmatpush1.bf16.msra.mxu0 0
        %460 = vmatprep.subr.bf16.mxu0 0
        %461 = vmatpush1.bf16.msra.mxu0 0
        %462 = vmatprep.subr.bf16.mxu0 0
        %463 = vmatpush1.bf16.msra.mxu0 0
        %464 = vmatprep.subr.bf16.mxu0 0
        %465 = vmatpush1.bf16.msra.mxu0 0
        %466 = vmatprep.subr.bf16.mxu0 0
        %467 = vmatpush1.bf16.msra.mxu0 0
        %468 = vmatprep.subr.bf16.mxu0 0
        %469 = vmatpush1.bf16.msra.mxu0 0
        %470 = vmatprep.subr.bf16.mxu0 0
        %471 = vmatpush1.bf16.msra.mxu0 0
        %472 = vmatprep.subr.bf16.mxu0 0
        %473 = vmatpush1.bf16.msra.mxu0 0
        %474 = vmatprep.subr.bf16.mxu0 0
        %475 = vmatpush1.bf16.msra.mxu0 0
        %476 = vmatprep.subr.bf16.mxu0 0
        %477 = vmatpush1.bf16.msra.mxu0 0
        %478 = vmatprep.subr.bf16.mxu0 0
        %479 = vmatpush1.bf16.msra.mxu0 0
        %480 = vmatprep.subr.bf16.mxu0 0
        %481 = vmatpush1.bf16.msra.mxu0 0
        %482 = vmatprep.mubr.bf16.mxu0 0
        %483 = vmatmul.mubr.bf16.gmra.mrb[0].mxu0 %v439
        %v484 = vpop.f32.mrb[0].mxu0
        %v485 = vadd.f32 0.0, %v484
        %v486 = vpop.f32.mrb[0].mxu0
        %v487 = vadd.f32 0.0, %v486
        %v488 = vpop.f32.mrb[0].mxu0
        %v489 = vpop.f32.mrb[0].mxu0
        %490 = vdwg.mxu0
        %491 = vmatprep.subr.bf16.mxu0 0
        %492 = vmatpush1.bf16.msra.mxu0 %v448
        %493 = vmatprep.subr.bf16.mxu0 0
        %494 = vmatpush1.bf16.msra.mxu0 0
        %495 = vmatprep.subr.bf16.mxu0 0
        %496 = vmatpush1.bf16.msra.mxu0 0
        %497 = vmatprep.subr.bf16.mxu0 0
        %498 = vmatpush1.bf16.msra.mxu0 0
        %499 = vmatprep.subr.bf16.mxu0 0
        %500 = vmatpush1.bf16.msra.mxu0 0
        %501 = vmatprep.subr.bf16.mxu0 0
        %502 = vmatpush1.bf16.msra.mxu0 0
        %503 = vmatprep.subr.bf16.mxu0 0
        %504 = vmatpush1.bf16.msra.mxu0 0
        %505 = vmatprep.subr.bf16.mxu0 0
        %506 = vmatpush1.bf16.msra.mxu0 0
        %507 = vmatprep.subr.bf16.mxu0 0
        %508 = vmatpush1.bf16.msra.mxu0 0
        %509 = vmatprep.subr.bf16.mxu0 0
        %510 = vmatpush1.bf16.msra.mxu0 0
        %511 = vmatprep.subr.bf16.mxu0 0
        %512 = vmatpush1.bf16.msra.mxu0 0
        %513 = vmatprep.subr.bf16.mxu0 0
        %514 = vmatpush1.bf16.msra.mxu0 0
        %515 = vmatprep.subr.bf16.mxu0 0
        %516 = vmatpush1.bf16.msra.mxu0 0
        %517 = vmatprep.subr.bf16.mxu0 0
        %518 = vmatpush1.bf16.msra.mxu0 0
        %519 = vmatprep.subr.bf16.mxu0 0
        %520 = vmatpush1.bf16.msra.mxu0 0
        %521 = vmatprep.subr.bf16.mxu0 0
        %522 = vmatpush1.bf16.msra.mxu0 0
        %523 = vmatprep.mubr.bf16.mxu0 0
        %524 = vmatmul.mubr.bf16.gmra.mrb[0].mxu0 %v439
        %v525 = vpop.f32.mrb[0].mxu0
        %v526 = vadd.f32 0.0, %v525
        %v527 = vpop.f32.mrb[0].mxu0
        %v528 = vpop.f32.mrb[0].mxu0
        %v529 = vpop.f32.mrb[0].mxu0
        %530 = vdwg.mxu0
        %v531 = vadd.f32 %v363, %v485
        %v532 = vadd.f32 %v365, %v487
        %v533 = vadd.f32 %v404, %v526
        %v534 = vld [vmem:[%s164] sm:$0x3f]
        %535 = vrot.lane.b32.xlu0 %v192, 116
        %v536 = vpop.permute.xlu0 %535
        %v538 = vcombine.high %v534, %v534
        %v540 = vunpack.c.l.s4 1983009808
        %v541 = vunpack.c.0.s8 %v540
        %v542 = vlaneseq
        %v543 = vshrl.u32 %v542, 7
        %v544 = vsub.s32 %v541, %v543
        %v545 = vrot.slane %v534, %v544
        %v547 = vunpack.c.l.s4 1983009808
        %v548 = vunpack.c.0.s8 %v547
        %v549 = vlaneseq
        %v550 = vshrl.u32 %v549, 7
        %v551 = vsub.s32 %v548, %v550
        %v552 = vrot.slane %v538, %v551
        %v553 = vcombine.high %v545, %v545
        %554 = vrot.lane.b32.xlu0 %v545, 110
        %v555 = vpop.permute.xlu0 %554
        %556 = vrot.lane.b32.xlu0 %v553, 110
        %v557 = vpop.permute.xlu0 %556
        %558 = vrot.lane.b32.xlu0 %v552, 110
        %v559 = vpop.permute.xlu0 %558
        %vm560 = vcmask 900096
        %v561 = vsel %vm560, %v555, %v557
        %v562 = vsel %vm560, %v557, %v559
        %v564 = vsel %vm221, %v536, 0
        %v567 = vsel %vm225, %v561, 0
        %v570 = vsel %vm225, %v562, 0
        %v573 = vsel %vm225, %v559, 0
        %575 = vmatprep.subr.bf16.mxu0 %v570
        %576 = vmatpush1.bf16.msra.mxu0 %v567
        %577 = vmatprep.subr.bf16.mxu0 0
        %578 = vmatpush1.bf16.msra.mxu0 0
        %579 = vmatprep.subr.bf16.mxu0 0
        %580 = vmatpush1.bf16.msra.mxu0 0
        %581 = vmatprep.subr.bf16.mxu0 0
        %582 = vmatpush1.bf16.msra.mxu0 0
        %583 = vmatprep.subr.bf16.mxu0 0
        %584 = vmatpush1.bf16.msra.mxu0 0
        %585 = vmatprep.subr.bf16.mxu0 0
        %586 = vmatpush1.bf16.msra.mxu0 0
        %587 = vmatprep.subr.bf16.mxu0 0
        %588 = vmatpush1.bf16.msra.mxu0 0
        %589 = vmatprep.subr.bf16.mxu0 0
        %590 = vmatpush1.bf16.msra.mxu0 0
        %591 = vmatprep.subr.bf16.mxu0 0
        %592 = vmatpush1.bf16.msra.mxu0 0
        %593 = vmatprep.subr.bf16.mxu0 0
        %594 = vmatpush1.bf16.msra.mxu0 0
        %595 = vmatprep.subr.bf16.mxu0 0
        %596 = vmatpush1.bf16.msra.mxu0 0
        %597 = vmatprep.subr.bf16.mxu0 0
        %598 = vmatpush1.bf16.msra.mxu0 0
        %599 = vmatprep.subr.bf16.mxu0 0
        %600 = vmatpush1.bf16.msra.mxu0 0
        %601 = vmatprep.subr.bf16.mxu0 0
        %602 = vmatpush1.bf16.msra.mxu0 0
        %603 = vmatprep.subr.bf16.mxu0 0
        %604 = vmatpush1.bf16.msra.mxu0 0
        %605 = vmatprep.subr.bf16.mxu0 0
        %606 = vmatpush1.bf16.msra.mxu0 0
        %607 = vmatprep.mubr.bf16.mxu0 0
        %608 = vmatmul.mubr.bf16.gmra.mrb[0].mxu0 %v564
        %v609 = vpop.f32.mrb[0].mxu0
        %v610 = vadd.f32 0.0, %v609
        %v611 = vpop.f32.mrb[0].mxu0
        %v612 = vadd.f32 0.0, %v611
        %v613 = vpop.f32.mrb[0].mxu0
        %v614 = vpop.f32.mrb[0].mxu0
        %615 = vdwg.mxu0
        %616 = vmatprep.subr.bf16.mxu0 0
        %617 = vmatpush1.bf16.msra.mxu0 %v573
        %618 = vmatprep.subr.bf16.mxu0 0
        %619 = vmatpush1.bf16.msra.mxu0 0
        %620 = vmatprep.subr.bf16.mxu0 0
        %621 = vmatpush1.bf16.msra.mxu0 0
        %622 = vmatprep.subr.bf16.mxu0 0
        %623 = vmatpush1.bf16.msra.mxu0 0
        %624 = vmatprep.subr.bf16.mxu0 0
        %625 = vmatpush1.bf16.msra.mxu0 0
        %626 = vmatprep.subr.bf16.mxu0 0
        %627 = vmatpush1.bf16.msra.mxu0 0
        %628 = vmatprep.subr.bf16.mxu0 0
        %629 = vmatpush1.bf16.msra.mxu0 0
        %630 = vmatprep.subr.bf16.mxu0 0
        %631 = vmatpush1.bf16.msra.mxu0 0
        %632 = vmatprep.subr.bf16.mxu0 0
        %633 = vmatpush1.bf16.msra.mxu0 0
        %634 = vmatprep.subr.bf16.mxu0 0
        %635 = vmatpush1.bf16.msra.mxu0 0
        %636 = vmatprep.subr.bf16.mxu0 0
        %637 = vmatpush1.bf16.msra.mxu0 0
        %638 = vmatprep.subr.bf16.mxu0 0
        %639 = vmatpush1.bf16.msra.mxu0 0
        %640 = vmatprep.subr.bf16.mxu0 0
        %641 = vmatpush1.bf16.msra.mxu0 0
        %642 = vmatprep.subr.bf16.mxu0 0
        %643 = vmatpush1.bf16.msra.mxu0 0
        %644 = vmatprep.subr.bf16.mxu0 0
        %645 = vmatpush1.bf16.msra.mxu0 0
        %646 = vmatprep.subr.bf16.mxu0 0
        %647 = vmatpush1.bf16.msra.mxu0 0
        %648 = vmatprep.mubr.bf16.mxu0 0
        %649 = vmatmul.mubr.bf16.gmra.mrb[0].mxu0 %v564
        %v650 = vpop.f32.mrb[0].mxu0
        %v651 = vadd.f32 0.0, %v650
        %v652 = vpop.f32.mrb[0].mxu0
        %v653 = vpop.f32.mrb[0].mxu0
        %v654 = vpop.f32.mrb[0].mxu0
        %655 = vdwg.mxu0
        %v656 = vadd.f32 %v531, %v610
        %v657 = vadd.f32 %v532, %v612
        %v658 = vadd.f32 %v533, %v651
        %v659 = vld [vmem:[%s164] sm:$0x3f]
        %660 = vrot.lane.b32.xlu0 %v192, 112
        %v661 = vpop.permute.xlu0 %660
        %v663 = vcombine.high %v659, %v659
        %v665 = vunpack.c.l.s4 1983009808
        %v666 = vunpack.c.0.s8 %v665
        %v667 = vlaneseq
        %v668 = vshrl.u32 %v667, 7
        %v669 = vsub.s32 %v666, %v668
        %v670 = vrot.slane %v659, %v669
        %v672 = vunpack.c.l.s4 1983009808
        %v673 = vunpack.c.0.s8 %v672
        %v674 = vlaneseq
        %v675 = vshrl.u32 %v674, 7
        %v676 = vsub.s32 %v673, %v675
        %v677 = vrot.slane %v663, %v676
        %v678 = vcombine.high %v670, %v670
        %679 = vrot.lane.b32.xlu0 %v670, 109
        %v680 = vpop.permute.xlu0 %679
        %681 = vrot.lane.b32.xlu0 %v678, 109
        %v682 = vpop.permute.xlu0 %681
        %683 = vrot.lane.b32.xlu0 %v677, 109
        %v684 = vpop.permute.xlu0 %683
        %vm685 = vcmask 891904
        %v686 = vsel %vm685, %v680, %v682
        %v687 = vsel %vm685, %v682, %v684
        %v689 = vsel %vm221, %v661, 0
        %v692 = vsel %vm225, %v686, 0
        %v695 = vsel %vm225, %v687, 0
        %v698 = vsel %vm225, %v684, 0
        %700 = vmatprep.subr.bf16.mxu0 %v695
        %701 = vmatpush1.bf16.msra.mxu0 %v692
        %702 = vmatprep.subr.bf16.mxu0 0
        %703 = vmatpush1.bf16.msra.mxu0 0
        %704 = vmatprep.subr.bf16.mxu0 0
        %705 = vmatpush1.bf16.msra.mxu0 0
        %706 = vmatprep.subr.bf16.mxu0 0
        %707 = vmatpush1.bf16.msra.mxu0 0
        %708 = vmatprep.subr.bf16.mxu0 0
        %709 = vmatpush1.bf16.msra.mxu0 0
        %710 = vmatprep.subr.bf16.mxu0 0
        %711 = vmatpush1.bf16.msra.mxu0 0
        %712 = vmatprep.subr.bf16.mxu0 0
        %713 = vmatpush1.bf16.msra.mxu0 0
        %714 = vmatprep.subr.bf16.mxu0 0
        %715 = vmatpush1.bf16.msra.mxu0 0
        %716 = vmatprep.subr.bf16.mxu0 0
        %717 = vmatpush1.bf16.msra.mxu0 0
        %718 = vmatprep.subr.bf16.mxu0 0
        %719 = vmatpush1.bf16.msra.mxu0 0
        %720 = vmatprep.subr.bf16.mxu0 0
        %721 = vmatpush1.bf16.msra.mxu0 0
        %722 = vmatprep.subr.bf16.mxu0 0
        %723 = vmatpush1.bf16.msra.mxu0 0
        %724 = vmatprep.subr.bf16.mxu0 0
        %725 = vmatpush1.bf16.msra.mxu0 0
        %726 = vmatprep.subr.bf16.mxu0 0
        %727 = vmatpush1.bf16.msra.mxu0 0
        %728 = vmatprep.subr.bf16.mxu0 0
        %729 = vmatpush1.bf16.msra.mxu0 0
        %730 = vmatprep.subr.bf16.mxu0 0
        %731 = vmatpush1.bf16.msra.mxu0 0
        %732 = vmatprep.mubr.bf16.mxu0 0
        %733 = vmatmul.mubr.bf16.gmra.mrb[0].mxu0 %v689
        %v734 = vpop.f32.mrb[0].mxu0
        %v735 = vadd.f32 0.0, %v734
        %v736 = vpop.f32.mrb[0].mxu0
        %v737 = vadd.f32 0.0, %v736
        %v738 = vpop.f32.mrb[0].mxu0
        %v739 = vpop.f32.mrb[0].mxu0
        %740 = vdwg.mxu0
        %741 = vmatprep.subr.bf16.mxu0 0
        %742 = vmatpush1.bf16.msra.mxu0 %v698
        %743 = vmatprep.subr.bf16.mxu0 0
        %744 = vmatpush1.bf16.msra.mxu0 0
        %745 = vmatprep.subr.bf16.mxu0 0
        %746 = vmatpush1.bf16.msra.mxu0 0
        %747 = vmatprep.subr.bf16.mxu0 0
        %748 = vmatpush1.bf16.msra.mxu0 0
        %749 = vmatprep.subr.bf16.mxu0 0
        %750 = vmatpush1.bf16.msra.mxu0 0
        %751 = vmatprep.subr.bf16.mxu0 0
        %752 = vmatpush1.bf16.msra.mxu0 0
        %753 = vmatprep.subr.bf16.mxu0 0
        %754 = vmatpush1.bf16.msra.mxu0 0
        %755 = vmatprep.subr.bf16.mxu0 0
        %756 = vmatpush1.bf16.msra.mxu0 0
        %757 = vmatprep.subr.bf16.mxu0 0
        %758 = vmatpush1.bf16.msra.mxu0 0
        %759 = vmatprep.subr.bf16.mxu0 0
        %760 = vmatpush1.bf16.msra.mxu0 0
        %761 = vmatprep.subr.bf16.mxu0 0
        %762 = vmatpush1.bf16.msra.mxu0 0
        %763 = vmatprep.subr.bf16.mxu0 0
        %764 = vmatpush1.bf16.msra.mxu0 0
        %765 = vmatprep.subr.bf16.mxu0 0
        %766 = vmatpush1.bf16.msra.mxu0 0
        %767 = vmatprep.subr.bf16.mxu0 0
        %768 = vmatpush1.bf16.msra.mxu0 0
        %769 = vmatprep.subr.bf16.mxu0 0
        %770 = vmatpush1.bf16.msra.mxu0 0
        %771 = vmatprep.subr.bf16.mxu0 0
        %772 = vmatpush1.bf16.msra.mxu0 0
        %773 = vmatprep.mubr.bf16.mxu0 0
        %774 = vmatmul.mubr.bf16.gmra.mrb[0].mxu0 %v689
        %v775 = vpop.f32.mrb[0].mxu0
        %v776 = vadd.f32 0.0, %v775
        %v777 = vpop.f32.mrb[0].mxu0
        %v778 = vpop.f32.mrb[0].mxu0
        %v779 = vpop.f32.mrb[0].mxu0
        %780 = vdwg.mxu0
        %v781 = vadd.f32 %v656, %v735
        %v782 = vadd.f32 %v657, %v737
        %v783 = vadd.f32 %v658, %v776
        %v784 = vld [vmem:[%s164] sm:$0x3f]
        %785 = vrot.lane.b32.xlu0 %v192, 108
        %v786 = vpop.permute.xlu0 %785
        %v788 = vcombine.high %v784, %v784
        %v790 = vunpack.c.l.s4 1983009808
        %v791 = vunpack.c.0.s8 %v790
        %v792 = vlaneseq
        %v793 = vshrl.u32 %v792, 7
        %v794 = vsub.s32 %v791, %v793
        %v795 = vrot.slane %v784, %v794
        %v797 = vunpack.c.l.s4 1983009808
        %v798 = vunpack.c.0.s8 %v797
        %v799 = vlaneseq
        %v800 = vshrl.u32 %v799, 7
        %v801 = vsub.s32 %v798, %v800
        %v802 = vrot.slane %v788, %v801
        %v803 = vcombine.high %v795, %v795
        %804 = vrot.lane.b32.xlu0 %v795, 108
        %v805 = vpop.permute.xlu0 %804
        %806 = vrot.lane.b32.xlu0 %v803, 108
        %v807 = vpop.permute.xlu0 %806
        %808 = vrot.lane.b32.xlu0 %v802, 108
        %v809 = vpop.permute.xlu0 %808
        %vm810 = vcmask 883712
        %v811 = vsel %vm810, %v805, %v807
        %v812 = vsel %vm810, %v807, %v809
        %v814 = vsel %vm221, %v786, 0
        %v817 = vsel %vm225, %v811, 0
        %v820 = vsel %vm225, %v812, 0
        %v823 = vsel %vm225, %v809, 0
        %825 = vmatprep.subr.bf16.mxu0 %v820
        %826 = vmatpush1.bf16.msra.mxu0 %v817
        %827 = vmatprep.subr.bf16.mxu0 0
        %828 = vmatpush1.bf16.msra.mxu0 0
        %829 = vmatprep.subr.bf16.mxu0 0
        %830 = vmatpush1.bf16.msra.mxu0 0
        %831 = vmatprep.subr.bf16.mxu0 0
        %832 = vmatpush1.bf16.msra.mxu0 0
        %833 = vmatprep.subr.bf16.mxu0 0
        %834 = vmatpush1.bf16.msra.mxu0 0
        %835 = vmatprep.subr.bf16.mxu0 0
        %836 = vmatpush1.bf16.msra.mxu0 0
        %837 = vmatprep.subr.bf16.mxu0 0
        %838 = vmatpush1.bf16.msra.mxu0 0
        %839 = vmatprep.subr.bf16.mxu0 0
        %840 = vmatpush1.bf16.msra.mxu0 0
        %841 = vmatprep.subr.bf16.mxu0 0
        %842 = vmatpush1.bf16.msra.mxu0 0
        %843 = vmatprep.subr.bf16.mxu0 0
        %844 = vmatpush1.bf16.msra.mxu0 0
        %845 = vmatprep.subr.bf16.mxu0 0
        %846 = vmatpush1.bf16.msra.mxu0 0
        %847 = vmatprep.subr.bf16.mxu0 0
        %848 = vmatpush1.bf16.msra.mxu0 0
        %849 = vmatprep.subr.bf16.mxu0 0
        %850 = vmatpush1.bf16.msra.mxu0 0
        %851 = vmatprep.subr.bf16.mxu0 0
        %852 = vmatpush1.bf16.msra.mxu0 0
        %853 = vmatprep.subr.bf16.mxu0 0
        %854 = vmatpush1.bf16.msra.mxu0 0
        %855 = vmatprep.subr.bf16.mxu0 0
        %856 = vmatpush1.bf16.msra.mxu0 0
        %857 = vmatprep.mubr.bf16.mxu0 0
        %858 = vmatmul.mubr.bf16.gmra.mrb[0].mxu0 %v814
        %v859 = vpop.f32.mrb[0].mxu0
        %v860 = vadd.f32 0.0, %v859
        %v861 = vpop.f32.mrb[0].mxu0
        %v862 = vadd.f32 0.0, %v861
        %v863 = vpop.f32.mrb[0].mxu0
        %v864 = vpop.f32.mrb[0].mxu0
        %865 = vdwg.mxu0
        %866 = vmatprep.subr.bf16.mxu0 0
        %867 = vmatpush1.bf16.msra.mxu0 %v823
        %868 = vmatprep.subr.bf16.mxu0 0
        %869 = vmatpush1.bf16.msra.mxu0 0
        %870 = vmatprep.subr.bf16.mxu0 0
        %871 = vmatpush1.bf16.msra.mxu0 0
        %872 = vmatprep.subr.bf16.mxu0 0
        %873 = vmatpush1.bf16.msra.mxu0 0
        %874 = vmatprep.subr.bf16.mxu0 0
        %875 = vmatpush1.bf16.msra.mxu0 0
        %876 = vmatprep.subr.bf16.mxu0 0
        %877 = vmatpush1.bf16.msra.mxu0 0
        %878 = vmatprep.subr.bf16.mxu0 0
        %879 = vmatpush1.bf16.msra.mxu0 0
        %880 = vmatprep.subr.bf16.mxu0 0
        %881 = vmatpush1.bf16.msra.mxu0 0
        %882 = vmatprep.subr.bf16.mxu0 0
        %883 = vmatpush1.bf16.msra.mxu0 0
        %884 = vmatprep.subr.bf16.mxu0 0
        %885 = vmatpush1.bf16.msra.mxu0 0
        %886 = vmatprep.subr.bf16.mxu0 0
        %887 = vmatpush1.bf16.msra.mxu0 0
        %888 = vmatprep.subr.bf16.mxu0 0
        %889 = vmatpush1.bf16.msra.mxu0 0
        %890 = vmatprep.subr.bf16.mxu0 0
        %891 = vmatpush1.bf16.msra.mxu0 0
        %892 = vmatprep.subr.bf16.mxu0 0
        %893 = vmatpush1.bf16.msra.mxu0 0
        %894 = vmatprep.subr.bf16.mxu0 0
        %895 = vmatpush1.bf16.msra.mxu0 0
        %896 = vmatprep.subr.bf16.mxu0 0
        %897 = vmatpush1.bf16.msra.mxu0 0
        %898 = vmatprep.mubr.bf16.mxu0 0
        %899 = vmatmul.mubr.bf16.gmra.mrb[0].mxu0 %v814
        %v900 = vpop.f32.mrb[0].mxu0
        %v901 = vadd.f32 0.0, %v900
        %v902 = vpop.f32.mrb[0].mxu0
        %v903 = vpop.f32.mrb[0].mxu0
        %v904 = vpop.f32.mrb[0].mxu0
        %905 = vdwg.mxu0
        %v906 = vadd.f32 %v781, %v860
        %v907 = vadd.f32 %v782, %v862
        %v908 = vadd.f32 %v783, %v901
        %v909 = vld [vmem:[%s164] sm:$0x3f]
        %910 = vrot.lane.b32.xlu0 %v192, 104
        %v911 = vpop.permute.xlu0 %910
        %v913 = vcombine.high %v909, %v909
        %v915 = vunpack.c.l.s4 1983009808
        %v916 = vunpack.c.0.s8 %v915
        %v917 = vlaneseq
        %v918 = vshrl.u32 %v917, 7
        %v919 = vsub.s32 %v916, %v918
        %v920 = vrot.slane %v909, %v919
        %v922 = vunpack.c.l.s4 1983009808
        %v923 = vunpack.c.0.s8 %v922
        %v924 = vlaneseq
        %v925 = vshrl.u32 %v924, 7
        %v926 = vsub.s32 %v923, %v925
        %v927 = vrot.slane %v913, %v926
        %v928 = vcombine.high %v920, %v920
        %929 = vrot.lane.b32.xlu0 %v920, 92
        %v930 = vpop.permute.xlu0 %929
        %931 = vrot.lane.b32.xlu0 %v928, 92
        %v932 = vpop.permute.xlu0 %931
        %933 = vrot.lane.b32.xlu0 %v927, 92
        %v934 = vpop.permute.xlu0 %933
        %vm935 = vcmask 752640
        %v936 = vsel %vm935, %v930, %v932
        %v937 = vsel %vm935, %v932, %v934
        %v939 = vsel %vm221, %v911, 0
        %v942 = vsel %vm225, %v936, 0
        %v945 = vsel %vm225, %v937, 0
        %v948 = vsel %vm225, %v934, 0
        %950 = vmatprep.subr.bf16.mxu0 %v945
        %951 = vmatpush1.bf16.msra.mxu0 %v942
        %952 = vmatprep.subr.bf16.mxu0 0
        %953 = vmatpush1.bf16.msra.mxu0 0
        %954 = vmatprep.subr.bf16.mxu0 0
        %955 = vmatpush1.bf16.msra.mxu0 0
        %956 = vmatprep.subr.bf16.mxu0 0
        %957 = vmatpush1.bf16.msra.mxu0 0
        %958 = vmatprep.subr.bf16.mxu0 0
        %959 = vmatpush1.bf16.msra.mxu0 0
        %960 = vmatprep.subr.bf16.mxu0 0
        %961 = vmatpush1.bf16.msra.mxu0 0
        %962 = vmatprep.subr.bf16.mxu0 0
        %963 = vmatpush1.bf16.msra.mxu0 0
        %964 = vmatprep.subr.bf16.mxu0 0
        %965 = vmatpush1.bf16.msra.mxu0 0
        %966 = vmatprep.subr.bf16.mxu0 0
        %967 = vmatpush1.bf16.msra.mxu0 0
        %968 = vmatprep.subr.bf16.mxu0 0
        %969 = vmatpush1.bf16.msra.mxu0 0
        %970 = vmatprep.subr.bf16.mxu0 0
        %971 = vmatpush1.bf16.msra.mxu0 0
        %972 = vmatprep.subr.bf16.mxu0 0
        %973 = vmatpush1.bf16.msra.mxu0 0
        %974 = vmatprep.subr.bf16.mxu0 0
        %975 = vmatpush1.bf16.msra.mxu0 0
        %976 = vmatprep.subr.bf16.mxu0 0
        %977 = vmatpush1.bf16.msra.mxu0 0
        %978 = vmatprep.subr.bf16.mxu0 0
        %979 = vmatpush1.bf16.msra.mxu0 0
        %980 = vmatprep.subr.bf16.mxu0 0
        %981 = vmatpush1.bf16.msra.mxu0 0
        %982 = vmatprep.mubr.bf16.mxu0 0
        %983 = vmatmul.mubr.bf16.gmra.mrb[0].mxu0 %v939
        %v984 = vpop.f32.mrb[0].mxu0
        %v985 = vadd.f32 0.0, %v984
        %v986 = vpop.f32.mrb[0].mxu0
        %v987 = vadd.f32 0.0, %v986
        %v988 = vpop.f32.mrb[0].mxu0
        %v989 = vpop.f32.mrb[0].mxu0
        %990 = vdwg.mxu0
        %991 = vmatprep.subr.bf16.mxu0 0
        %992 = vmatpush1.bf16.msra.mxu0 %v948
        %993 = vmatprep.subr.bf16.mxu0 0
        %994 = vmatpush1.bf16.msra.mxu0 0
        %995 = vmatprep.subr.bf16.mxu0 0
        %996 = vmatpush1.bf16.msra.mxu0 0
        %997 = vmatprep.subr.bf16.mxu0 0
        %998 = vmatpush1.bf16.msra.mxu0 0
        %999 = vmatprep.subr.bf16.mxu0 0
        %1000 = vmatpush1.bf16.msra.mxu0 0
        %1001 = vmatprep.subr.bf16.mxu0 0
        %1002 = vmatpush1.bf16.msra.mxu0 0
        %1003 = vmatprep.subr.bf16.mxu0 0
        %1004 = vmatpush1.bf16.msra.mxu0 0
        %1005 = vmatprep.subr.bf16.mxu0 0
        %1006 = vmatpush1.bf16.msra.mxu0 0
        %1007 = vmatprep.subr.bf16.mxu0 0
        %1008 = vmatpush1.bf16.msra.mxu0 0
        %1009 = vmatprep.subr.bf16.mxu0 0
        %1010 = vmatpush1.bf16.msra.mxu0 0
        %1011 = vmatprep.subr.bf16.mxu0 0
        %1012 = vmatpush1.bf16.msra.mxu0 0
        %1013 = vmatprep.subr.bf16.mxu0 0
        %1014 = vmatpush1.bf16.msra.mxu0 0
        %1015 = vmatprep.subr.bf16.mxu0 0
        %1016 = vmatpush1.bf16.msra.mxu0 0
        %1017 = vmatprep.subr.bf16.mxu0 0
        %1018 = vmatpush1.bf16.msra.mxu0 0
        %1019 = vmatprep.subr.bf16.mxu0 0
        %1020 = vmatpush1.bf16.msra.mxu0 0
        %1021 = vmatprep.subr.bf16.mxu0 0
        %1022 = vmatpush1.bf16.msra.mxu0 0
        %1023 = vmatprep.mubr.bf16.mxu0 0
        %1024 = vmatmul.mubr.bf16.gmra.mrb[0].mxu0 %v939
        %v1025 = vpop.f32.mrb[0].mxu0
        %v1026 = vadd.f32 0.0, %v1025
        %v1027 = vpop.f32.mrb[0].mxu0
        %v1028 = vpop.f32.mrb[0].mxu0
        %v1029 = vpop.f32.mrb[0].mxu0
        %1030 = vdwg.mxu0
        %v1031 = vadd.f32 %v906, %v985
        %v1032 = vadd.f32 %v907, %v987
        %v1033 = vadd.f32 %v908, %v1026
        %v1034 = vld [vmem:[%s164] sm:$0x3f]
        %1035 = vrot.lane.b32.xlu0 %v192, 100
        %v1036 = vpop.permute.xlu0 %1035
        %v1038 = vcombine.high %v1034, %v1034
        %v1040 = vunpack.c.l.s4 1983009808
        %v1041 = vunpack.c.0.s8 %v1040
        %v1042 = vlaneseq
        %v1043 = vshrl.u32 %v1042, 7
        %v1044 = vsub.s32 %v1041, %v1043
        %v1045 = vrot.slane %v1034, %v1044
        %v1047 = vunpack.c.l.s4 1983009808
        %v1048 = vunpack.c.0.s8 %v1047
        %v1049 = vlaneseq
        %v1050 = vshrl.u32 %v1049, 7
        %v1051 = vsub.s32 %v1048, %v1050
        %v1052 = vrot.slane %v1038, %v1051
        %v1053 = vcombine.high %v1045, %v1045
        %1054 = vrot.lane.b32.xlu0 %v1045, 91
        %v1055 = vpop.permute.xlu0 %1054
        %1056 = vrot.lane.b32.xlu0 %v1053, 91
        %v1057 = vpop.permute.xlu0 %1056
        %1058 = vrot.lane.b32.xlu0 %v1052, 91
        %v1059 = vpop.permute.xlu0 %1058
        %vm1060 = vcmask 744448
        %v1061 = vsel %vm1060, %v1055, %v1057
        %v1062 = vsel %vm1060, %v1057, %v1059
        %v1064 = vsel %vm221, %v1036, 0
        %v1067 = vsel %vm225, %v1061, 0
        %v1070 = vsel %vm225, %v1062, 0
        %v1073 = vsel %vm225, %v1059, 0
        %1075 = vmatprep.subr.bf16.mxu0 %v1070
        %1076 = vmatpush1.bf16.msra.mxu0 %v1067
        %1077 = vmatprep.subr.bf16.mxu0 0
        %1078 = vmatpush1.bf16.msra.mxu0 0
        %1079 = vmatprep.subr.bf16.mxu0 0
        %1080 = vmatpush1.bf16.msra.mxu0 0
        %1081 = vmatprep.subr.bf16.mxu0 0
        %1082 = vmatpush1.bf16.msra.mxu0 0
        %1083 = vmatprep.subr.bf16.mxu0 0
        %1084 = vmatpush1.bf16.msra.mxu0 0
        %1085 = vmatprep.subr.bf16.mxu0 0
        %1086 = vmatpush1.bf16.msra.mxu0 0
        %1087 = vmatprep.subr.bf16.mxu0 0
        %1088 = vmatpush1.bf16.msra.mxu0 0
        %1089 = vmatprep.subr.bf16.mxu0 0
        %1090 = vmatpush1.bf16.msra.mxu0 0
        %1091 = vmatprep.subr.bf16.mxu0 0
        %1092 = vmatpush1.bf16.msra.mxu0 0
        %1093 = vmatprep.subr.bf16.mxu0 0
        %1094 = vmatpush1.bf16.msra.mxu0 0
        %1095 = vmatprep.subr.bf16.mxu0 0
        %1096 = vmatpush1.bf16.msra.mxu0 0
        %1097 = vmatprep.subr.bf16.mxu0 0
        %1098 = vmatpush1.bf16.msra.mxu0 0
        %1099 = vmatprep.subr.bf16.mxu0 0
        %1100 = vmatpush1.bf16.msra.mxu0 0
        %1101 = vmatprep.subr.bf16.mxu0 0
        %1102 = vmatpush1.bf16.msra.mxu0 0
        %1103 = vmatprep.subr.bf16.mxu0 0
        %1104 = vmatpush1.bf16.msra.mxu0 0
        %1105 = vmatprep.subr.bf16.mxu0 0
        %1106 = vmatpush1.bf16.msra.mxu0 0
        %1107 = vmatprep.mubr.bf16.mxu0 0
        %1108 = vmatmul.mubr.bf16.gmra.mrb[0].mxu0 %v1064
        %v1109 = vpop.f32.mrb[0].mxu0
        %v1110 = vadd.f32 0.0, %v1109
        %v1111 = vpop.f32.mrb[0].mxu0
        %v1112 = vadd.f32 0.0, %v1111
        %v1113 = vpop.f32.mrb[0].mxu0
        %v1114 = vpop.f32.mrb[0].mxu0
        %1115 = vdwg.mxu0
        %1116 = vmatprep.subr.bf16.mxu0 0
        %1117 = vmatpush1.bf16.msra.mxu0 %v1073
        %1118 = vmatprep.subr.bf16.mxu0 0
        %1119 = vmatpush1.bf16.msra.mxu0 0
        %1120 = vmatprep.subr.bf16.mxu0 0
        %1121 = vmatpush1.bf16.msra.mxu0 0
        %1122 = vmatprep.subr.bf16.mxu0 0
        %1123 = vmatpush1.bf16.msra.mxu0 0
        %1124 = vmatprep.subr.bf16.mxu0 0
        %1125 = vmatpush1.bf16.msra.mxu0 0
        %1126 = vmatprep.subr.bf16.mxu0 0
        %1127 = vmatpush1.bf16.msra.mxu0 0
        %1128 = vmatprep.subr.bf16.mxu0 0
        %1129 = vmatpush1.bf16.msra.mxu0 0
        %1130 = vmatprep.subr.bf16.mxu0 0
        %1131 = vmatpush1.bf16.msra.mxu0 0
        %1132 = vmatprep.subr.bf16.mxu0 0
        %1133 = vmatpush1.bf16.msra.mxu0 0
        %1134 = vmatprep.subr.bf16.mxu0 0
        %1135 = vmatpush1.bf16.msra.mxu0 0
        %1136 = vmatprep.subr.bf16.mxu0 0
        %1137 = vmatpush1.bf16.msra.mxu0 0
        %1138 = vmatprep.subr.bf16.mxu0 0
        %1139 = vmatpush1.bf16.msra.mxu0 0
        %1140 = vmatprep.subr.bf16.mxu0 0
        %1141 = vmatpush1.bf16.msra.mxu0 0
        %1142 = vmatprep.subr.bf16.mxu0 0
        %1143 = vmatpush1.bf16.msra.mxu0 0
        %1144 = vmatprep.subr.bf16.mxu0 0
        %1145 = vmatpush1.bf16.msra.mxu0 0
        %1146 = vmatprep.subr.bf16.mxu0 0
        %1147 = vmatpush1.bf16.msra.mxu0 0
        %1148 = vmatprep.mubr.bf16.mxu0 0
        %1149 = vmatmul.mubr.bf16.gmra.mrb[0].mxu0 %v1064
        %v1150 = vpop.f32.mrb[0].mxu0
        %v1151 = vadd.f32 0.0, %v1150
        %v1152 = vpop.f32.mrb[0].mxu0
        %v1153 = vpop.f32.mrb[0].mxu0
        %v1154 = vpop.f32.mrb[0].mxu0
        %1155 = vdwg.mxu0
        %v1156 = vadd.f32 %v1031, %v1110
        %v1157 = vadd.f32 %v1032, %v1112
        %v1158 = vadd.f32 %v1033, %v1151
        %v1159 = vld [vmem:[%s164] sm:$0x3f]
        %1160 = vrot.lane.b32.xlu0 %v192, 96
        %v1161 = vpop.permute.xlu0 %1160
        %v1163 = vcombine.high %v1159, %v1159
        %v1165 = vunpack.c.l.s4 1983009808
        %v1166 = vunpack.c.0.s8 %v1165
        %v1167 = vlaneseq
        %v1168 = vshrl.u32 %v1167, 7
        %v1169 = vsub.s32 %v1166, %v1168
        %v1170 = vrot.slane %v1159, %v1169
        %v1172 = vunpack.c.l.s4 1983009808
        %v1173 = vunpack.c.0.s8 %v1172
        %v1174 = vlaneseq
        %v1175 = vshrl.u32 %v1174, 7
        %v1176 = vsub.s32 %v1173, %v1175
        %v1177 = vrot.slane %v1163, %v1176
        %v1178 = vcombine.high %v1170, %v1170
        %1179 = vrot.lane.b32.xlu0 %v1170, 90
        %v1180 = vpop.permute.xlu0 %1179
        %1181 = vrot.lane.b32.xlu0 %v1178, 90
        %v1182 = vpop.permute.xlu0 %1181
        %1183 = vrot.lane.b32.xlu0 %v1177, 90
        %v1184 = vpop.permute.xlu0 %1183
        %vm1185 = vcmask 736256
        %v1186 = vsel %vm1185, %v1180, %v1182
        %v1187 = vsel %vm1185, %v1182, %v1184
        %v1189 = vsel %vm221, %v1161, 0
        %v1192 = vsel %vm225, %v1186, 0
        %v1195 = vsel %vm225, %v1187, 0
        %v1198 = vsel %vm225, %v1184, 0
        %1200 = vmatprep.subr.bf16.mxu0 %v1195
        %1201 = vmatpush1.bf16.msra.mxu0 %v1192
        %1202 = vmatprep.subr.bf16.mxu0 0
        %1203 = vmatpush1.bf16.msra.mxu0 0
        %1204 = vmatprep.subr.bf16.mxu0 0
        %1205 = vmatpush1.bf16.msra.mxu0 0
        %1206 = vmatprep.subr.bf16.mxu0 0
        %1207 = vmatpush1.bf16.msra.mxu0 0
        %1208 = vmatprep.subr.bf16.mxu0 0
        %1209 = vmatpush1.bf16.msra.mxu0 0
        %1210 = vmatprep.subr.bf16.mxu0 0
        %1211 = vmatpush1.bf16.msra.mxu0 0
        %1212 = vmatprep.subr.bf16.mxu0 0
        %1213 = vmatpush1.bf16.msra.mxu0 0
        %1214 = vmatprep.subr.bf16.mxu0 0
        %1215 = vmatpush1.bf16.msra.mxu0 0
        %1216 = vmatprep.subr.bf16.mxu0 0
        %1217 = vmatpush1.bf16.msra.mxu0 0
        %1218 = vmatprep.subr.bf16.mxu0 0
        %1219 = vmatpush1.bf16.msra.mxu0 0
        %1220 = vmatprep.subr.bf16.mxu0 0
        %1221 = vmatpush1.bf16.msra.mxu0 0
        %1222 = vmatprep.subr.bf16.mxu0 0
        %1223 = vmatpush1.bf16.msra.mxu0 0
        %1224 = vmatprep.subr.bf16.mxu0 0
        %1225 = vmatpush1.bf16.msra.mxu0 0
        %1226 = vmatprep.subr.bf16.mxu0 0
        %1227 = vmatpush1.bf16.msra.mxu0 0
        %1228 = vmatprep.subr.bf16.mxu0 0
        %1229 = vmatpush1.bf16.msra.mxu0 0
        %1230 = vmatprep.subr.bf16.mxu0 0
        %1231 = vmatpush1.bf16.msra.mxu0 0
        %1232 = vmatprep.mubr.bf16.mxu0 0
        %1233 = vmatmul.mubr.bf16.gmra.mrb[0].mxu0 %v1189
        %v1234 = vpop.f32.mrb[0].mxu0
        %v1235 = vadd.f32 0.0, %v1234
        %v1236 = vpop.f32.mrb[0].mxu0
        %v1237 = vadd.f32 0.0, %v1236
        %v1238 = vpop.f32.mrb[0].mxu0
        %v1239 = vpop.f32.mrb[0].mxu0
        %1240 = vdwg.mxu0
        %1241 = vmatprep.subr.bf16.mxu0 0
        %1242 = vmatpush1.bf16.msra.mxu0 %v1198
        %1243 = vmatprep.subr.bf16.mxu0 0
        %1244 = vmatpush1.bf16.msra.mxu0 0
        %1245 = vmatprep.subr.bf16.mxu0 0
        %1246 = vmatpush1.bf16.msra.mxu0 0
        %1247 = vmatprep.subr.bf16.mxu0 0
        %1248 = vmatpush1.bf16.msra.mxu0 0
        %1249 = vmatprep.subr.bf16.mxu0 0
        %1250 = vmatpush1.bf16.msra.mxu0 0
        %1251 = vmatprep.subr.bf16.mxu0 0
        %1252 = vmatpush1.bf16.msra.mxu0 0
        %1253 = vmatprep.subr.bf16.mxu0 0
        %1254 = vmatpush1.bf16.msra.mxu0 0
        %1255 = vmatprep.subr.bf16.mxu0 0
        %1256 = vmatpush1.bf16.msra.mxu0 0
        %1257 = vmatprep.subr.bf16.mxu0 0
        %1258 = vmatpush1.bf16.msra.mxu0 0
        %1259 = vmatprep.subr.bf16.mxu0 0
        %1260 = vmatpush1.bf16.msra.mxu0 0
        %1261 = vmatprep.subr.bf16.mxu0 0
        %1262 = vmatpush1.bf16.msra.mxu0 0
        %1263 = vmatprep.subr.bf16.mxu0 0
        %1264 = vmatpush1.bf16.msra.mxu0 0
        %1265 = vmatprep.subr.bf16.mxu0 0
        %1266 = vmatpush1.bf16.msra.mxu0 0
        %1267 = vmatprep.subr.bf16.mxu0 0
        %1268 = vmatpush1.bf16.msra.mxu0 0
        %1269 = vmatprep.subr.bf16.mxu0 0
        %1270 = vmatpush1.bf16.msra.mxu0 0
        %1271 = vmatprep.subr.bf16.mxu0 0
        %1272 = vmatpush1.bf16.msra.mxu0 0
        %1273 = vmatprep.mubr.bf16.mxu0 0
        %1274 = vmatmul.mubr.bf16.gmra.mrb[0].mxu0 %v1189
        %v1275 = vpop.f32.mrb[0].mxu0
        %v1276 = vadd.f32 0.0, %v1275
        %v1277 = vpop.f32.mrb[0].mxu0
        %v1278 = vpop.f32.mrb[0].mxu0
        %v1279 = vpop.f32.mrb[0].mxu0
        %1280 = vdwg.mxu0
        %v1281 = vadd.f32 %v1156, %v1235
        %v1282 = vadd.f32 %v1157, %v1237
        %v1283 = vadd.f32 %v1158, %v1276
        %v1284 = vld [vmem:[%s2] sm:$0xff]
        %1286 = vset.pattern.permute.xlu0 0
        %1287 = vperm.xlu0 %1286, %v1284
        %v1288 = vpop.permute.xlu0 %1287
        %v1290 = vadd.f32 %v1281, %v1288
        %v1291 = vadd.f32 %v1282, %v1288
        %v1292 = vadd.f32 %v1283, %v1288
        %vm1293 = vcmp.ge.f32.partialorder %v1290, 0.0
        %vm1294 = vcmp.ge.f32.partialorder %v1291, 0.0
        %vm1295 = vcmp.ge.f32.partialorder %v1292, 0.0
        %v1296 = vmul.f32 %v1290, 0.2
        %v1297 = vmul.f32 %v1291, 0.2
        %v1298 = vmul.f32 %v1292, 0.2
        %v1299 = vsel %vm1293, %v1290, %v1296
        %v1300 = vsel %vm1294, %v1291, %v1297
        %v1301 = vsel %vm1295, %v1292, %v1298
        %vm1302 = vcmask 130048
        %1303 = vst.msk [vmem:[%s186] sm:$0xff] %vm1302, %v1299
        %1305 = vrot.lane.b32.xlu0 %v1299, 126
        %v1306 = vpop.permute.xlu0 %1305
        %vm1308 = vcmask 261248
        %1309 = vst.msk [vmem:[%s186] sm:$0xff] %vm1308, %v1306
        %1310 = vrot.lane.b32.xlu0 %v1299, 124
        %v1311 = vpop.permute.xlu0 %1310
        %vm1313 = vcmask 392448
        %1314 = vst.msk [vmem:[%s186] sm:$0xff] %vm1313, %v1311
        %1315 = vrot.lane.b32.xlu0 %v1299, 122
        %v1316 = vpop.permute.xlu0 %1315
        %vm1318 = vcmask 523648
        %1319 = vst.msk [vmem:[%s186] sm:$0xff] %vm1318, %v1316
        %1320 = vrot.lane.b32.xlu0 %v1299, 120
        %v1321 = vpop.permute.xlu0 %1320
        %vm1323 = vcmask 654848
        %1324 = vst.msk [vmem:[%s186] sm:$0xff] %vm1323, %v1321
        %1325 = vrot.lane.b32.xlu0 %v1299, 118
        %v1326 = vpop.permute.xlu0 %1325
        %vm1328 = vcmask 786048
        %1329 = vst.msk [vmem:[%s186] sm:$0xff] %vm1328, %v1326
        %1330 = vrot.lane.b32.xlu0 %v1299, 116
        %v1331 = vpop.permute.xlu0 %1330
        %vm1333 = vcmask 917248
        %1334 = vst.msk [vmem:[%s186] sm:$0xff] %vm1333, %v1331
        %1336 = vrot.lane.b32.xlu0 %v1299, 114
        %v1337 = vpop.permute.xlu0 %1336
        %1338 = vrot.lane.b32.xlu0 %v1300, 114
        %v1339 = vpop.permute.xlu0 %1338
        %vm1340 = vcmask 932864
        %v1341 = vsel %vm1340, %v1337, %v1339
        %vm1343 = vcmask 1048448
        %1344 = vst.msk [vmem:[%s186] sm:$0xff] %vm1343, %v1341
        %1345 = vrot.lane.b32.xlu0 %v1300, 112
        %v1346 = vpop.permute.xlu0 %1345
        %1348 = vst.msk [vmem:[%s186 + $0x8] sm:$0xff] %vm1302, %v1346
        %1349 = vrot.lane.b32.xlu0 %v1300, 110
        %v1350 = vpop.permute.xlu0 %1349
        %1352 = vst.msk [vmem:[%s186 + $0x8] sm:$0xff] %vm1308, %v1350
        %1353 = vrot.lane.b32.xlu0 %v1300, 108
        %v1354 = vpop.permute.xlu0 %1353
        %1356 = vst.msk [vmem:[%s186 + $0x8] sm:$0xff] %vm1313, %v1354
        %1357 = vrot.lane.b32.xlu0 %v1300, 106
        %v1358 = vpop.permute.xlu0 %1357
        %1360 = vst.msk [vmem:[%s186 + $0x8] sm:$0xff] %vm1318, %v1358
        %1361 = vrot.lane.b32.xlu0 %v1300, 104
        %v1362 = vpop.permute.xlu0 %1361
        %1364 = vst.msk [vmem:[%s186 + $0x8] sm:$0xff] %vm1323, %v1362
        %1365 = vrot.lane.b32.xlu0 %v1300, 102
        %v1366 = vpop.permute.xlu0 %1365
        %1368 = vst.msk [vmem:[%s186 + $0x8] sm:$0xff] %vm1328, %v1366
        %1370 = vrot.lane.b32.xlu0 %v1300, 100
        %v1371 = vpop.permute.xlu0 %1370
        %1372 = vrot.lane.b32.xlu0 %v1301, 100
        %v1373 = vpop.permute.xlu0 %1372
        %vm1374 = vcmask 818176
        %v1375 = vsel %vm1374, %v1371, %v1373
        %1377 = vst.msk [vmem:[%s186 + $0x8] sm:$0xff] %vm1333, %v1375
        %1378 = vrot.lane.b32.xlu0 %v1301, 98
        %v1379 = vpop.permute.xlu0 %1378
        %1381 = vst.msk [vmem:[%s186 + $0x8] sm:$0xff] %vm1343, %v1379
        %s1382 = sand.u32 %s96, 1
        %s1383 = scalar_lea.sflag [#allocation4], %s1382
        %s1384 = sand.u32 %s96, 1
        %s1385 = smul.addr %s1384, 16
        %s1386 = scalar_lea.vmem [#allocation5], %s1385
        // Predicated region
        $region37: #{tpu_custom_call.1} parent=31 // pred_check
          %p1387 = pneg %p106
        $region38: #{tpu_custom_call.1} parent=31 // pred_check_branch
          %1389 = sbr.rel (%p1387) target = $region40
        $region39: #{tpu_custom_call.1} parent=31 // pred_region
          %s1391 = ssub.s32 256, 256
          %1392 = vsyncadd %s1383, %s1391
          %s1393 = smul.addr %s20, 2
          %s1394 = smul.addr %s1393, 128
          %s1395 = scalar_lea.hbm %s3, %s1394
          %s1397 = sshll.u32 %s1386, 4
          %s1398 = int_to_ptr.vmem [resolvable:$true] %s1397
          %1400 = dma.vmem_to_hbm [thread:$0]  %s1398, 256, %s1395, %s1383
        $region40: #{tpu_custom_call.1} parent=31 // pred_fallthru
          _
      $region32: #{tpu_custom_call.1} parent=5 // pred_fallthru
        _
      %p1401 = scmp.le.s32.totalorder 2, %s15
      // Predicated region
      $region41: #{tpu_custom_call.1} parent=5 // pred_check
        %p1402 = pneg %p1401
      $region42: #{tpu_custom_call.1} parent=5 // pred_check_branch
        %1404 = sbr.rel (%p1402) target = $region44
      $region43: #{tpu_custom_call.1} parent=5 // pred_region
        %s1405 = ssub.s32 %s15, 2
        // Predicated region
        $region45: #{tpu_custom_call.1} parent=43 // pred_check
          %p1406 = pneg %p112
        $region46: #{tpu_custom_call.1} parent=43 // pred_check_branch
          %1408 = sbr.rel (%p1406) target = $region48
        $region47: #{tpu_custom_call.1} parent=43 // pred_region
          %s1409 = sand.u32 %s97, 1
          %s1410 = scalar_lea.sflag [#allocation4], %s1409
          %s1411 = sand.u32 %s97, 1
          %s1412 = smul.addr %s1411, 16
          %s1413 = scalar_lea.vmem [#allocation5], %s1412
          %1414 = dma.done %s1410, 256
        $region48: #{tpu_custom_call.1} parent=43 // pred_fallthru
          _
      $region44: #{tpu_custom_call.1} parent=5 // pred_fallthru
        _
    $region6: #{tpu_custom_call.1} parent=1 // loop_footer
      %s19 = sadd.s32 1, %s15
    $region7: #{tpu_custom_call.1} parent=1 // loop_footer_branch
      %14 = sbr.rel target = $region3
    $region8: #{tpu_custom_call.1} parent=1 // loop_exit
      _
    %1415 = vsyncpa [#allocation3], 1
    %s1416 = scalar_lea.sflag [#allocation3], 1
    %1417 = vsyncpa %s1416, 1
    %1418 = vsyncpa [#allocation4], 1
    %s1419 = scalar_lea.sflag [#allocation4], 1
    %1420 = vsyncpa %s1419, 1

</llo_original>
